<compile_context>
chip_gen: v6e
topology: v6e:2x2x1
jax: 0.10.0
libtpu: 0.0.40
codegen_flags: <defaults>
</compile_context>

<pallas_src>
import functools

import jax
import jax.numpy as jnp
import numpy as np
from jax import lax
from jax.experimental import pallas as pl
from jax.experimental.pallas import tpu as pltpu

NHIDDEN = 128
EPS = 1e-5


def spade_kernel(x_ref, segcol_ref, mask_ref, w1_ref, b1_ref, wgb_ref, bgb_ref,
                 mean_ref, invstd_ref, out_ref, *, th, w, wp):
    """One (batch, row-tile) grid step.

    x_ref      : (1, th*w, Cx)            f32   feature rows of this tile
    segcol_ref : (1, 1, (th+2)*wp, 9*Cin) bf16  im2col'd segmap (padded grid)
    mask_ref   : (1, (th+2)*wp, 1)        f32   1 inside image, 0 on zero-pad
    w1_ref     : (9*Cin, 128)             bf16  mlp_shared weight (im2col)
    b1_ref     : (1, 128)                 f32
    wgb_ref    : (9, 128, 2*Cx)           bf16  per-tap fused [gamma|beta]
    bgb_ref    : (1, 2*Cx)                f32
    mean_ref   : (1, Cx)                  f32   BN mean
    invstd_ref : (1, Cx)                  f32   BN 1/sqrt(var+eps)
    out_ref    : (1, th*w, Cx)            f32
    """
    chid = w1_ref.shape[-1]
    cx2 = wgb_ref.shape[-1]
    cx = cx2 // 2
    p2 = (th + 2) * wp

    # ---- mlp_shared: single im2col matmul (K = 9*Cin) + bias + ReLU + mask.
    segcol = segcol_ref[...].reshape(p2, w1_ref.shape[0])
    acc1 = jnp.dot(segcol, w1_ref[...], preferred_element_type=jnp.float32)
    actv = jnp.maximum(acc1 + b1_ref[...], 0.0) * mask_ref[0]
    actv = actv.reshape(th + 2, wp, chid)                 # f32, halo included

    # ---- fused mlp_gamma|mlp_beta: 9 taps, each (th*w,128) x (128,2*Cx).
    # dy slices the free major axis; dx needs one sublane-shifted slice each.
    acc2 = jnp.zeros((th * w, cx2), jnp.float32)
    for dx in range(3):
        window = actv[:, dx:dx + w, :]                    # (th+2, w, 128)
        for dy in range(3):
            patch = window[dy:dy + th].reshape(th * w, chid)
            acc2 = acc2 + jnp.dot(patch.astype(jnp.bfloat16),
                                  wgb_ref[dy * 3 + dx],
                                  preferred_element_type=jnp.float32)
    gb = acc2 + bgb_ref[...]
    gamma = gb[:, :cx]
    beta = gb[:, cx:]

    # ---- param-free BN (precomputed stats) + SPADE modulation, all f32.
    xn = (x_ref[0] - mean_ref[...]) * invstd_ref[...]
    out_ref[0] = xn * (1.0 + gamma) + beta


def _nearest_resize_nchw(seg, h, w):
    # PyTorch F.interpolate(mode='nearest'): src = floor(dst * in / out)
    _, _, hs, ws = seg.shape
    ri = (jnp.arange(h) * hs // h).astype(jnp.int32)
    ci = (jnp.arange(w) * ws // w).astype(jnp.int32)
    return seg[:, :, ri[:, None], ci[None, :]]


def _taps(w_oihw):
    # (Cout, Cin, 3, 3) -> (9, Cin, Cout), tap index t = ky*3 + kx
    cout, cin = w_oihw.shape[0], w_oihw.shape[1]
    return jnp.transpose(w_oihw, (2, 3, 1, 0)).reshape(9, cin, cout)


def _im2col_padded_grid(seg_nhwc, wp):
    """im2col of a 3x3/pad=1 conv evaluated on the padded (H+2, wp) grid.

    Returns (B, H+2, wp, 9*Cin); padded-grid position (i, j) corresponds to
    image position (i-1, j-1), with zero padding outside the image.
    """
    b, h, w, cin = seg_nhwc.shape
    hp = h + 2
    segp = jnp.pad(seg_nhwc, ((0, 0), (2, 2), (2, wp - w), (0, 0)))
    cols = []
    for ky in range(3):
        for kx in range(3):
            cols.append(segp[:, ky:ky + hp, kx:kx + wp, :])
    return jnp.concatenate(cols, axis=-1)


def spade_forward(x_nchw, segmap_nchw, params, *, row_tile=8):
    b, cx, h, w = x_nchw.shape
    cin = segmap_nchw.shape[1]
    chid = params['w_shared'].shape[0]

    # Row tile: largest divisor of H that is <= row_tile (keep small for v7x).
    th = min(row_tile, h)
    while h % th:
        th -= 1
    nt = h // th
    wp = ((w + 2 + 7) // 8) * 8                    # padded width, multiple of 8
    p2 = (th + 2) * wp
    k1 = 9 * cin

    # ---- cheap XLA-side prep (memory-bound) ------------------------------
    seg = _nearest_resize_nchw(segmap_nchw, h, w)
    seg = jnp.transpose(seg, (0, 2, 3, 1)).astype(jnp.float32)        # NHWC
    x = jnp.transpose(x_nchw, (0, 2, 3, 1)).astype(jnp.float32)       # NHWC
    x_flat = x.reshape(b, h * w, cx)

    # Param-free BN stats: separate tiny f32 pass (training-mode, biased var).
    mean = jnp.mean(x_flat, axis=(0, 1))
    var = jnp.mean(jnp.square(x_flat - mean), axis=(0, 1))
    invstd = lax.rsqrt(var + EPS)
    mean = mean.reshape(1, cx)
    invstd = invstd.reshape(1, cx)

    # im2col of the segmap over the padded activation grid, then gather the
    # overlapping (th+2)-row window per tile (2-row halo recompute).
    col = _im2col_padded_grid(seg, wp)                                # (B,H+2,wp,k1)
    rows = jnp.arange(nt)[:, None] * th + jnp.arange(th + 2)[None, :]  # (nt,th+2)
    segcol = col[:, rows].reshape(b, nt, p2, k1).astype(jnp.bfloat16)

    # {0,1} validity mask over the padded grid (zero-pad semantics of layer 2).
    img_row = rows - 1
    row_ok = (img_row >= 0) & (img_row < h)                           # (nt,th+2)
    img_col = jnp.arange(wp) - 1
    col_ok = (img_col >= 0) & (img_col < w)                           # (wp,)
    mask = (row_ok[:, :, None] & col_ok[None, None, :]).astype(jnp.float32)
    mask = mask.reshape(nt, p2, 1)

    # Weights: im2col-flattened layer 1; fused [gamma|beta] layer 2; bf16.
    w1 = _taps(params['w_shared']).reshape(k1, chid).astype(jnp.bfloat16)
    b1 = params['b_shared'].reshape(1, chid).astype(jnp.float32)
    wgb = jnp.concatenate([_taps(params['w_gamma']), _taps(params['w_beta'])],
                          axis=-1).astype(jnp.bfloat16)               # (9,128,2cx)
    bgb = jnp.concatenate([params['b_gamma'], params['b_beta']]
                          ).reshape(1, 2 * cx).astype(jnp.float32)

    flops = int(2 * b * nt * (p2 * k1 * chid + 9 * th * w * chid * 2 * cx))
    bytes_accessed = int(sum(a.size * a.dtype.itemsize for a in
                             (x_flat, segcol, mask, w1, b1, wgb, bgb, mean,
                              invstd)) + b * h * w * cx * 4)

    out_flat = pl.pallas_call(
        functools.partial(spade_kernel, th=th, w=w, wp=wp),
        out_shape=jax.ShapeDtypeStruct((b, h * w, cx), jnp.float32),
        grid=(b, nt),
        in_specs=[
            pl.BlockSpec((1, th * w, cx), lambda bi, ti: (bi, ti, 0)),
            pl.BlockSpec((1, 1, p2, k1), lambda bi, ti: (bi, ti, 0, 0)),
            pl.BlockSpec((1, p2, 1), lambda bi, ti: (ti, 0, 0)),
            pl.BlockSpec((k1, chid), lambda bi, ti: (0, 0)),
            pl.BlockSpec((1, chid), lambda bi, ti: (0, 0)),
            pl.BlockSpec((9, chid, 2 * cx), lambda bi, ti: (0, 0, 0)),
            pl.BlockSpec((1, 2 * cx), lambda bi, ti: (0, 0)),
            pl.BlockSpec((1, cx), lambda bi, ti: (0, 0)),
            pl.BlockSpec((1, cx), lambda bi, ti: (0, 0)),
        ],
        out_specs=pl.BlockSpec((1, th * w, cx), lambda bi, ti: (bi, ti, 0)),
        compiler_params=pltpu.CompilerParams(
            dimension_semantics=("parallel", "parallel"),
            vmem_limit_bytes=32 * 1024 * 1024,
        ),
        cost_estimate=pl.CostEstimate(flops=flops, transcendentals=0,
                                      bytes_accessed=bytes_accessed),
    )(x_flat, segcol, mask, w1, b1, wgb, bgb, mean, invstd)

    out = out_flat.reshape(b, h, w, cx)
    return jnp.transpose(out, (0, 3, 1, 2))                           # NCHW


def spade_reference(x_nchw, segmap_nchw, params):
    """Pure-JAX f32 reference with the module's exact semantics."""
    b, cx, h, w = x_nchw.shape
    seg = _nearest_resize_nchw(segmap_nchw, h, w)
    x = jnp.transpose(x_nchw, (0, 2, 3, 1)).astype(jnp.float32)
    seg = jnp.transpose(seg, (0, 2, 3, 1)).astype(jnp.float32)

    mean = jnp.mean(x, axis=(0, 1, 2), keepdims=True)
    var = jnp.mean((x - mean) ** 2, axis=(0, 1, 2), keepdims=True)
    normalized = (x - mean) / jnp.sqrt(var + EPS)

    def conv(inp, w_oihw, bias):
        wk = jnp.transpose(w_oihw, (2, 3, 1, 0))  # HWIO
        y = lax.conv_general_dilated(inp, wk, (1, 1), 'SAME',
                                     dimension_numbers=('NHWC', 'HWIO', 'NHWC'))
        return y + bias

    actv = jax.nn.relu(conv(seg, params['w_shared'], params['b_shared']))
    gamma = conv(actv, params['w_gamma'], params['b_gamma'])
    beta = conv(actv, params['w_beta'], params['b_beta'])
    out = normalized * (1.0 + gamma) + beta
    return jnp.transpose(out, (0, 3, 1, 2))


if __name__ == "__main__":
    # norm_nc=4, label_nc=4, 16x16 feature map, segmap at 8x8 so the
    # nearest-interpolation path is exercised; row_tile=8 -> 2x2 grid.
    B, norm_nc, H, W = 2, 4, 16, 16
    label_nc, Hs, Ws = 4, 8, 8

    key = jax.random.PRNGKey(0)
    k = jax.random.split(key, 8)
    x = jax.random.normal(k[0], (B, norm_nc, H, W), jnp.float32)
    segmap = jax.random.normal(k[1], (B, label_nc, Hs, Ws), jnp.float32)

    params = {
        'w_shared': 0.1 * jax.random.normal(k[2], (NHIDDEN, label_nc, 3, 3), jnp.float32),
        'b_shared': 0.1 * jax.random.normal(k[3], (NHIDDEN,), jnp.float32),
        'w_gamma':  0.1 * jax.random.normal(k[4], (norm_nc, NHIDDEN, 3, 3), jnp.float32),
        'b_gamma':  0.1 * jax.random.normal(k[5], (norm_nc,), jnp.float32),
        'w_beta':   0.1 * jax.random.normal(k[6], (norm_nc, NHIDDEN, 3, 3), jnp.float32),
        'b_beta':   0.1 * jax.random.normal(k[7], (norm_nc,), jnp.float32),
    }

    out = jax.block_until_ready(spade_forward(x, segmap, params))
    ref = jax.block_until_ready(spade_reference(x, segmap, params))

    assert out.shape == (B, norm_nc, H, W), out.shape
    # Matmul operands are bf16 (f32 accumulation) -> compare at bf16 tolerance.
    np.testing.assert_allclose(np.asarray(out), np.asarray(ref),
                               rtol=5e-2, atol=5e-2)
    print("KERNEL_OK")
</pallas_src>

<mosaic_0001>
module attributes {stable_mosaic.version = 11 : i64} {
  func.func @spade_kernel(%arg0: i32, %arg1: i32, %arg2: memref<1x128x4xf32, #tpu.memory_space<vmem>>, %arg3: memref<1x1x240x36xbf16, #tpu.memory_space<vmem>>, %arg4: memref<1x240x1xf32, #tpu.memory_space<vmem>>, %arg5: memref<36x128xbf16, #tpu.memory_space<vmem>>, %arg6: memref<1x128xf32, #tpu.memory_space<vmem>>, %arg7: memref<9x128x8xbf16, #tpu.memory_space<vmem>>, %arg8: memref<1x8xf32, #tpu.memory_space<vmem>>, %arg9: memref<1x4xf32, #tpu.memory_space<vmem>>, %arg10: memref<1x4xf32, #tpu.memory_space<vmem>>, %arg11: memref<1x128x4xf32, #tpu.memory_space<vmem>>) attributes {dimension_semantics = [#tpu.dimension_semantics<parallel>, #tpu.dimension_semantics<parallel>], iteration_bounds = array<i64: 2, 2>, scalar_prefetch = 0 : i64, scratch_operands = 0 : i64, tpu.core_type = #tpu.core_type<tc>, window_params = [{transform_indices = @transform_0, window_bounds = array<i64: 1, 128, 4>}, {transform_indices = @transform_1, window_bounds = array<i64: 1, 1, 240, 36>}, {transform_indices = @transform_2, window_bounds = array<i64: 1, 240, 1>}, {pipeline_mode = #tpu.pipeline_mode<synchronous>, transform_indices = @transform_3, window_bounds = array<i64: 36, 128>}, {pipeline_mode = #tpu.pipeline_mode<synchronous>, transform_indices = @transform_4, window_bounds = array<i64: 1, 128>}, {pipeline_mode = #tpu.pipeline_mode<synchronous>, transform_indices = @transform_5, window_bounds = array<i64: 9, 128, 8>}, {pipeline_mode = #tpu.pipeline_mode<synchronous>, transform_indices = @transform_6, window_bounds = array<i64: 1, 8>}, {pipeline_mode = #tpu.pipeline_mode<synchronous>, transform_indices = @transform_7, window_bounds = array<i64: 1, 4>}, {pipeline_mode = #tpu.pipeline_mode<synchronous>, transform_indices = @transform_8, window_bounds = array<i64: 1, 4>}, {transform_indices = @transform_9, window_bounds = array<i64: 1, 128, 4>}]} {
    %c0 = arith.constant 0 : index
    %c0_0 = arith.constant 0 : index
    %c0_1 = arith.constant 0 : index
    %c0_2 = arith.constant 0 : index
    %0 = vector.load %arg3[%c0, %c0_0, %c0_1, %c0_2] : memref<1x1x240x36xbf16, #tpu.memory_space<vmem>>, vector<1x1x240x36xbf16>
    %1 = vector.shape_cast %0 : vector<1x1x240x36xbf16> to vector<240x36xbf16>
    %c0_3 = arith.constant 0 : index
    %c0_4 = arith.constant 0 : index
    %2 = vector.load %arg5[%c0_3, %c0_4] : memref<36x128xbf16, #tpu.memory_space<vmem>>, vector<36x128xbf16>
    %cst = arith.constant dense<0.000000e+00> : vector<240x128xf32>
    %3 = tpu.matmul %1, %2, %cst {dimension_numbers = #tpu.dot_dimension_numbers<[1], [0], [0], [1], [0, 0, 1, 1], [], []>} : vector<240x36xbf16>, vector<36x128xbf16>, vector<240x128xf32> -> vector<240x128xf32>
    %c0_5 = arith.constant 0 : index
    %c0_6 = arith.constant 0 : index
    %4 = vector.load %arg6[%c0_5, %c0_6] : memref<1x128xf32, #tpu.memory_space<vmem>>, vector<1x128xf32>
    %5 = vector.broadcast %4 : vector<1x128xf32> to vector<240x128xf32>
    %6 = arith.addf %3, %5 : vector<240x128xf32>
    %cst_7 = arith.constant 0.000000e+00 : f32
    %7 = vector.broadcast %cst_7 : f32 to vector<240x128xf32>
    %8 = arith.maximumf %6, %7 : vector<240x128xf32>
    %c0_8 = arith.constant 0 : index
    %c0_9 = arith.constant 0 : index
    %c0_10 = arith.constant 0 : index
    %9 = vector.load %arg4[%c0_8, %c0_9, %c0_10] : memref<1x240x1xf32, #tpu.memory_space<vmem>>, vector<1x240x1xf32>
    %10 = vector.shape_cast %9 : vector<1x240x1xf32> to vector<240x1xf32>
    %11 = vector.broadcast %10 : vector<240x1xf32> to vector<240x128xf32>
    %12 = arith.mulf %8, %11 : vector<240x128xf32>
    %13 = vector.shape_cast %12 : vector<240x128xf32> to vector<10x24x128xf32>
    %cst_11 = arith.constant 0.000000e+00 : f32
    %14 = vector.broadcast %cst_11 : f32 to vector<128x8xf32>
    %15 = vector.extract_strided_slice %13 {offsets = [0, 0, 0], sizes = [10, 16, 128], strides = [1, 1, 1]} : vector<10x24x128xf32> to vector<10x16x128xf32>
    %16 = vector.extract_strided_slice %15 {offsets = [0, 0, 0], sizes = [8, 16, 128], strides = [1, 1, 1]} : vector<10x16x128xf32> to vector<8x16x128xf32>
    %17 = vector.shape_cast %16 : vector<8x16x128xf32> to vector<128x128xf32>
    %18 = arith.truncf %17 : vector<128x128xf32> to vector<128x128xbf16>
    %c0_12 = arith.constant 0 : index
    %c0_13 = arith.constant 0 : index
    %c0_14 = arith.constant 0 : index
    %19 = vector.load %arg7[%c0_12, %c0_13, %c0_14] : memref<9x128x8xbf16, #tpu.memory_space<vmem>>, vector<1x128x8xbf16>
    %20 = vector.shape_cast %19 : vector<1x128x8xbf16> to vector<128x8xbf16>
    %cst_15 = arith.constant dense<0.000000e+00> : vector<128x8xf32>
    %21 = tpu.matmul %18, %20, %cst_15 {dimension_numbers = #tpu.dot_dimension_numbers<[1], [0], [0], [1], [0, 0, 1, 1], [], []>} : vector<128x128xbf16>, vector<128x8xbf16>, vector<128x8xf32> -> vector<128x8xf32>
    %22 = arith.addf %14, %21 : vector<128x8xf32>
    %23 = vector.extract_strided_slice %15 {offsets = [1, 0, 0], sizes = [8, 16, 128], strides = [1, 1, 1]} : vector<10x16x128xf32> to vector<8x16x128xf32>
    %24 = vector.shape_cast %23 : vector<8x16x128xf32> to vector<128x128xf32>
    %25 = arith.truncf %24 : vector<128x128xf32> to vector<128x128xbf16>
    %c3 = arith.constant 3 : index
    %c0_16 = arith.constant 0 : index
    %c0_17 = arith.constant 0 : index
    %26 = vector.load %arg7[%c3, %c0_16, %c0_17] : memref<9x128x8xbf16, #tpu.memory_space<vmem>>, vector<1x128x8xbf16>
    %27 = vector.shape_cast %26 : vector<1x128x8xbf16> to vector<128x8xbf16>
    %cst_18 = arith.constant dense<0.000000e+00> : vector<128x8xf32>
    %28 = tpu.matmul %25, %27, %cst_18 {dimension_numbers = #tpu.dot_dimension_numbers<[1], [0], [0], [1], [0, 0, 1, 1], [], []>} : vector<128x128xbf16>, vector<128x8xbf16>, vector<128x8xf32> -> vector<128x8xf32>
    %29 = arith.addf %22, %28 : vector<128x8xf32>
    %30 = vector.extract_strided_slice %15 {offsets = [2, 0, 0], sizes = [8, 16, 128], strides = [1, 1, 1]} : vector<10x16x128xf32> to vector<8x16x128xf32>
    %31 = vector.shape_cast %30 : vector<8x16x128xf32> to vector<128x128xf32>
    %32 = arith.truncf %31 : vector<128x128xf32> to vector<128x128xbf16>
    %c6 = arith.constant 6 : index
    %c0_19 = arith.constant 0 : index
    %c0_20 = arith.constant 0 : index
    %33 = vector.load %arg7[%c6, %c0_19, %c0_20] : memref<9x128x8xbf16, #tpu.memory_space<vmem>>, vector<1x128x8xbf16>
    %34 = vector.shape_cast %33 : vector<1x128x8xbf16> to vector<128x8xbf16>
    %cst_21 = arith.constant dense<0.000000e+00> : vector<128x8xf32>
    %35 = tpu.matmul %32, %34, %cst_21 {dimension_numbers = #tpu.dot_dimension_numbers<[1], [0], [0], [1], [0, 0, 1, 1], [], []>} : vector<128x128xbf16>, vector<128x8xbf16>, vector<128x8xf32> -> vector<128x8xf32>
    %36 = arith.addf %29, %35 : vector<128x8xf32>
    %37 = vector.extract_strided_slice %13 {offsets = [0, 1, 0], sizes = [10, 16, 128], strides = [1, 1, 1]} : vector<10x24x128xf32> to vector<10x16x128xf32>
    %38 = vector.extract_strided_slice %37 {offsets = [0, 0, 0], sizes = [8, 16, 128], strides = [1, 1, 1]} : vector<10x16x128xf32> to vector<8x16x128xf32>
    %39 = vector.shape_cast %38 : vector<8x16x128xf32> to vector<128x128xf32>
    %40 = arith.truncf %39 : vector<128x128xf32> to vector<128x128xbf16>
    %c1 = arith.constant 1 : index
    %c0_22 = arith.constant 0 : index
    %c0_23 = arith.constant 0 : index
    %41 = vector.load %arg7[%c1, %c0_22, %c0_23] : memref<9x128x8xbf16, #tpu.memory_space<vmem>>, vector<1x128x8xbf16>
    %42 = vector.shape_cast %41 : vector<1x128x8xbf16> to vector<128x8xbf16>
    %cst_24 = arith.constant dense<0.000000e+00> : vector<128x8xf32>
    %43 = tpu.matmul %40, %42, %cst_24 {dimension_numbers = #tpu.dot_dimension_numbers<[1], [0], [0], [1], [0, 0, 1, 1], [], []>} : vector<128x128xbf16>, vector<128x8xbf16>, vector<128x8xf32> -> vector<128x8xf32>
    %44 = arith.addf %36, %43 : vector<128x8xf32>
    %45 = vector.extract_strided_slice %37 {offsets = [1, 0, 0], sizes = [8, 16, 128], strides = [1, 1, 1]} : vector<10x16x128xf32> to vector<8x16x128xf32>
    %46 = vector.shape_cast %45 : vector<8x16x128xf32> to vector<128x128xf32>
    %47 = arith.truncf %46 : vector<128x128xf32> to vector<128x128xbf16>
    %c4 = arith.constant 4 : index
    %c0_25 = arith.constant 0 : index
    %c0_26 = arith.constant 0 : index
    %48 = vector.load %arg7[%c4, %c0_25, %c0_26] : memref<9x128x8xbf16, #tpu.memory_space<vmem>>, vector<1x128x8xbf16>
    %49 = vector.shape_cast %48 : vector<1x128x8xbf16> to vector<128x8xbf16>
    %cst_27 = arith.constant dense<0.000000e+00> : vector<128x8xf32>
    %50 = tpu.matmul %47, %49, %cst_27 {dimension_numbers = #tpu.dot_dimension_numbers<[1], [0], [0], [1], [0, 0, 1, 1], [], []>} : vector<128x128xbf16>, vector<128x8xbf16>, vector<128x8xf32> -> vector<128x8xf32>
    %51 = arith.addf %44, %50 : vector<128x8xf32>
    %52 = vector.extract_strided_slice %37 {offsets = [2, 0, 0], sizes = [8, 16, 128], strides = [1, 1, 1]} : vector<10x16x128xf32> to vector<8x16x128xf32>
    %53 = vector.shape_cast %52 : vector<8x16x128xf32> to vector<128x128xf32>
    %54 = arith.truncf %53 : vector<128x128xf32> to vector<128x128xbf16>
    %c7 = arith.constant 7 : index
    %c0_28 = arith.constant 0 : index
    %c0_29 = arith.constant 0 : index
    %55 = vector.load %arg7[%c7, %c0_28, %c0_29] : memref<9x128x8xbf16, #tpu.memory_space<vmem>>, vector<1x128x8xbf16>
    %56 = vector.shape_cast %55 : vector<1x128x8xbf16> to vector<128x8xbf16>
    %cst_30 = arith.constant dense<0.000000e+00> : vector<128x8xf32>
    %57 = tpu.matmul %54, %56, %cst_30 {dimension_numbers = #tpu.dot_dimension_numbers<[1], [0], [0], [1], [0, 0, 1, 1], [], []>} : vector<128x128xbf16>, vector<128x8xbf16>, vector<128x8xf32> -> vector<128x8xf32>
    %58 = arith.addf %51, %57 : vector<128x8xf32>
    %59 = vector.extract_strided_slice %13 {offsets = [0, 2, 0], sizes = [10, 16, 128], strides = [1, 1, 1]} : vector<10x24x128xf32> to vector<10x16x128xf32>
    %60 = vector.extract_strided_slice %59 {offsets = [0, 0, 0], sizes = [8, 16, 128], strides = [1, 1, 1]} : vector<10x16x128xf32> to vector<8x16x128xf32>
    %61 = vector.shape_cast %60 : vector<8x16x128xf32> to vector<128x128xf32>
    %62 = arith.truncf %61 : vector<128x128xf32> to vector<128x128xbf16>
    %c2 = arith.constant 2 : index
    %c0_31 = arith.constant 0 : index
    %c0_32 = arith.constant 0 : index
    %63 = vector.load %arg7[%c2, %c0_31, %c0_32] : memref<9x128x8xbf16, #tpu.memory_space<vmem>>, vector<1x128x8xbf16>
    %64 = vector.shape_cast %63 : vector<1x128x8xbf16> to vector<128x8xbf16>
    %cst_33 = arith.constant dense<0.000000e+00> : vector<128x8xf32>
    %65 = tpu.matmul %62, %64, %cst_33 {dimension_numbers = #tpu.dot_dimension_numbers<[1], [0], [0], [1], [0, 0, 1, 1], [], []>} : vector<128x128xbf16>, vector<128x8xbf16>, vector<128x8xf32> -> vector<128x8xf32>
    %66 = arith.addf %58, %65 : vector<128x8xf32>
    %67 = vector.extract_strided_slice %59 {offsets = [1, 0, 0], sizes = [8, 16, 128], strides = [1, 1, 1]} : vector<10x16x128xf32> to vector<8x16x128xf32>
    %68 = vector.shape_cast %67 : vector<8x16x128xf32> to vector<128x128xf32>
    %69 = arith.truncf %68 : vector<128x128xf32> to vector<128x128xbf16>
    %c5 = arith.constant 5 : index
    %c0_34 = arith.constant 0 : index
    %c0_35 = arith.constant 0 : index
    %70 = vector.load %arg7[%c5, %c0_34, %c0_35] : memref<9x128x8xbf16, #tpu.memory_space<vmem>>, vector<1x128x8xbf16>
    %71 = vector.shape_cast %70 : vector<1x128x8xbf16> to vector<128x8xbf16>
    %cst_36 = arith.constant dense<0.000000e+00> : vector<128x8xf32>
    %72 = tpu.matmul %69, %71, %cst_36 {dimension_numbers = #tpu.dot_dimension_numbers<[1], [0], [0], [1], [0, 0, 1, 1], [], []>} : vector<128x128xbf16>, vector<128x8xbf16>, vector<128x8xf32> -> vector<128x8xf32>
    %73 = arith.addf %66, %72 : vector<128x8xf32>
    %74 = vector.extract_strided_slice %59 {offsets = [2, 0, 0], sizes = [8, 16, 128], strides = [1, 1, 1]} : vector<10x16x128xf32> to vector<8x16x128xf32>
    %75 = vector.shape_cast %74 : vector<8x16x128xf32> to vector<128x128xf32>
    %76 = arith.truncf %75 : vector<128x128xf32> to vector<128x128xbf16>
    %c8 = arith.constant 8 : index
    %c0_37 = arith.constant 0 : index
    %c0_38 = arith.constant 0 : index
    %77 = vector.load %arg7[%c8, %c0_37, %c0_38] : memref<9x128x8xbf16, #tpu.memory_space<vmem>>, vector<1x128x8xbf16>
    %78 = vector.shape_cast %77 : vector<1x128x8xbf16> to vector<128x8xbf16>
    %cst_39 = arith.constant dense<0.000000e+00> : vector<128x8xf32>
    %79 = tpu.matmul %76, %78, %cst_39 {dimension_numbers = #tpu.dot_dimension_numbers<[1], [0], [0], [1], [0, 0, 1, 1], [], []>} : vector<128x128xbf16>, vector<128x8xbf16>, vector<128x8xf32> -> vector<128x8xf32>
    %80 = arith.addf %73, %79 : vector<128x8xf32>
    %c0_40 = arith.constant 0 : index
    %c0_41 = arith.constant 0 : index
    %81 = vector.load %arg8[%c0_40, %c0_41] : memref<1x8xf32, #tpu.memory_space<vmem>>, vector<1x8xf32>
    %82 = vector.broadcast %81 : vector<1x8xf32> to vector<128x8xf32>
    %83 = arith.addf %80, %82 : vector<128x8xf32>
    %84 = vector.extract_strided_slice %83 {offsets = [0, 0], sizes = [128, 4], strides = [1, 1]} : vector<128x8xf32> to vector<128x4xf32>
    %85 = vector.extract_strided_slice %83 {offsets = [0, 4], sizes = [128, 4], strides = [1, 1]} : vector<128x8xf32> to vector<128x4xf32>
    %c0_42 = arith.constant 0 : index
    %c0_43 = arith.constant 0 : index
    %c0_44 = arith.constant 0 : index
    %86 = vector.load %arg2[%c0_42, %c0_43, %c0_44] : memref<1x128x4xf32, #tpu.memory_space<vmem>>, vector<1x128x4xf32>
    %87 = vector.shape_cast %86 : vector<1x128x4xf32> to vector<128x4xf32>
    %c0_45 = arith.constant 0 : index
    %c0_46 = arith.constant 0 : index
    %88 = vector.load %arg9[%c0_45, %c0_46] : memref<1x4xf32, #tpu.memory_space<vmem>>, vector<1x4xf32>
    %89 = vector.broadcast %88 : vector<1x4xf32> to vector<128x4xf32>
    %90 = arith.subf %87, %89 : vector<128x4xf32>
    %c0_47 = arith.constant 0 : index
    %c0_48 = arith.constant 0 : index
    %91 = vector.load %arg10[%c0_47, %c0_48] : memref<1x4xf32, #tpu.memory_space<vmem>>, vector<1x4xf32>
    %92 = vector.broadcast %91 : vector<1x4xf32> to vector<128x4xf32>
    %93 = arith.mulf %90, %92 : vector<128x4xf32>
    %cst_49 = arith.constant 1.000000e+00 : f32
    %94 = vector.broadcast %cst_49 : f32 to vector<128x4xf32>
    %95 = arith.addf %94, %84 : vector<128x4xf32>
    %96 = arith.mulf %93, %95 : vector<128x4xf32>
    %97 = arith.addf %96, %85 : vector<128x4xf32>
    %c0_50 = arith.constant 0 : index
    %c0_51 = arith.constant 0 : index
    %c0_52 = arith.constant 0 : index
    %98 = vector.load %arg11[%c0_50, %c0_51, %c0_52] : memref<1x128x4xf32, #tpu.memory_space<vmem>>, vector<1x128x4xf32>
    %99 = vector.shape_cast %98 : vector<1x128x4xf32> to vector<128x4xf32>
    %100 = vector.shape_cast %97 : vector<128x4xf32> to vector<1x128x4xf32>
    tpu.vector_store %arg11[%c0_50, %c0_51, %c0_52], %100 {strides = array<i32>} : memref<1x128x4xf32, #tpu.memory_space<vmem>>, vector<1x128x4xf32>,
    return
  }
  func.func @transform_0(%arg0: i32, %arg1: i32) -> (i32, i32, i32) {
    %c0_i32 = arith.constant 0 : i32
    %c0_i32_0 = arith.constant 0 : i32
    return %arg0, %arg1, %c0_i32 : i32, i32, i32
  }
  func.func @transform_1(%arg0: i32, %arg1: i32) -> (i32, i32, i32, i32) {
    %c0_i32 = arith.constant 0 : i32
    %c0_i32_0 = arith.constant 0 : i32
    %c0_i32_1 = arith.constant 0 : i32
    return %arg0, %arg1, %c0_i32, %c0_i32_0 : i32, i32, i32, i32
  }
  func.func @transform_2(%arg0: i32, %arg1: i32) -> (i32, i32, i32) {
    %c0_i32 = arith.constant 0 : i32
    %c0_i32_0 = arith.constant 0 : i32
    %c0_i32_1 = arith.constant 0 : i32
    return %arg1, %c0_i32, %c0_i32_0 : i32, i32, i32
  }
  func.func @transform_3(%arg0: i32, %arg1: i32) -> (i32, i32) {
    %c0_i32 = arith.constant 0 : i32
    %c0_i32_0 = arith.constant 0 : i32
    %c0_i32_1 = arith.constant 0 : i32
    return %c0_i32, %c0_i32_0 : i32, i32
  }
  func.func @transform_4(%arg0: i32, %arg1: i32) -> (i32, i32) {
    %c0_i32 = arith.constant 0 : i32
    %c0_i32_0 = arith.constant 0 : i32
    %c0_i32_1 = arith.constant 0 : i32
    return %c0_i32, %c0_i32_0 : i32, i32
  }
  func.func @transform_5(%arg0: i32, %arg1: i32) -> (i32, i32, i32) {
    %c0_i32 = arith.constant 0 : i32
    %c0_i32_0 = arith.constant 0 : i32
    %c0_i32_1 = arith.constant 0 : i32
    %c0_i32_2 = arith.constant 0 : i32
    return %c0_i32, %c0_i32_0, %c0_i32_1 : i32, i32, i32
  }
  func.func @transform_6(%arg0: i32, %arg1: i32) -> (i32, i32) {
    %c0_i32 = arith.constant 0 : i32
    %c0_i32_0 = arith.constant 0 : i32
    %c0_i32_1 = arith.constant 0 : i32
    return %c0_i32, %c0_i32_0 : i32, i32
  }
  func.func @transform_7(%arg0: i32, %arg1: i32) -> (i32, i32) {
    %c0_i32 = arith.constant 0 : i32
    %c0_i32_0 = arith.constant 0 : i32
    %c0_i32_1 = arith.constant 0 : i32
    return %c0_i32, %c0_i32_0 : i32, i32
  }
  func.func @transform_8(%arg0: i32, %arg1: i32) -> (i32, i32) {
    %c0_i32 = arith.constant 0 : i32
    %c0_i32_0 = arith.constant 0 : i32
    %c0_i32_1 = arith.constant 0 : i32
    return %c0_i32, %c0_i32_0 : i32, i32
  }
  func.func @transform_9(%arg0: i32, %arg1: i32) -> (i32, i32, i32) {
    %c0_i32 = arith.constant 0 : i32
    %c0_i32_0 = arith.constant 0 : i32
    return %arg0, %arg1, %c0_i32 : i32, i32, i32
  }
}

</mosaic_0001>

<llo_original>
// kernel: tpu_custom_call.1
$region0: #{tpu_custom_call.1}
  #allocation0 [shape = 'u32[]', space=smem, size = 0x4, offset = 0x4, fixed_abs, tag = 'smem constant byte address 0x4 - core index']
  #allocation1 [shape = 'u32[144,128]{1,0:T(1,128)}', space=vmem, size = 0x12000, scoped, tag = 'internal scratch']
  %s0 = inlined_call_operand.vmem [shape: f32[2,256,4], index: 0, kind: input, shape index: {}]
  %s1 = inlined_call_operand.vmem [shape: bf16[2,2,240,36], index: 1, kind: input, shape index: {}]
  %s2 = inlined_call_operand.vmem [shape: f32[2,240,1], index: 2, kind: input, shape index: {}]
  %s3 = inlined_call_operand.vmem [shape: bf16[36,128], index: 3, kind: input, shape index: {}]
  %s4 = inlined_call_operand.vmem [shape: f32[1,128], index: 4, kind: input, shape index: {}]
  %s5 = inlined_call_operand.vmem [shape: bf16[9,128,8], index: 5, kind: input, shape index: {}]
  %s6 = inlined_call_operand.vmem [shape: f32[1,8], index: 6, kind: input, shape index: {}]
  %s7 = inlined_call_operand.vmem [shape: f32[1,4], index: 7, kind: input, shape index: {}]
  %s8 = inlined_call_operand.vmem [shape: f32[1,4], index: 8, kind: input, shape index: {}]
  %s9 = inlined_call_operand.vmem [shape: f32[2,256,4], index: 9, kind: output, shape index: {}]
  %s10 = sld [smem:[#allocation0]]
  $region69: #{tpu_custom_call.1} parent=0
    _
  %s12 = ssub.s32 1, %s10
  %s13 = scalar_select 0, %s12, %s10
  loop: start=0, step=1, limit=6
  $region2: #{tpu_custom_call.1} parent=0 // loop_pre_header
    _
  $region3: #{tpu_custom_call.1} parent=0 // loop_header
    %s15 = sphi 0, %s19
    %p16 = scmp.ge.s32.totalorder %s15, 6
    %s22 = sphi 0, %s34
    %s23 = sphi 0, %s30
    %s24 = sphi 0, %s22
    %s25 = sphi 0, %s23
    %s26 = sphi 0, %s24
    %s27 = sphi 0, %s25
    %s39 = sphi 0, %s41
    %s42 = sphi 0, %s39
    %s43 = sphi 0, %s42
    %s59 = sphi 0, %s43
    %s67 = sphi 0, %s69
    %s70 = sphi 0, %s67
    %s71 = sphi 0, %s70
    %s87 = sphi 0, %s71
    %s93 = sphi 0, %s95
    %s96 = sphi 0, %s93
    %s97 = sphi 0, %s96
    %s113 = sphi 0, %s97
    %s117 = sphi 0, %s117
    %s119 = sphi 0, %s117
    %s120 = sphi 0, %s119
    %s134 = sphi 0, %s120
    %s138 = sphi 0, %s138
    %s140 = sphi 0, %s138
    %s141 = sphi 0, %s140
    %s155 = sphi 0, %s141
    %s159 = sphi 0, %s159
    %s161 = sphi 0, %s159
    %s162 = sphi 0, %s161
    %s176 = sphi 0, %s162
    %s180 = sphi 0, %s180
    %s182 = sphi 0, %s180
    %s183 = sphi 0, %s182
    %s197 = sphi 0, %s183
    %s201 = sphi 0, %s201
    %s203 = sphi 0, %s201
    %s204 = sphi 0, %s203
    %s218 = sphi 0, %s204
    %s222 = sphi 0, %s222
    %s224 = sphi 0, %s222
    %s225 = sphi 0, %s224
    %s239 = sphi 0, %s225
    %s247 = sphi 0, %s249
    %s250 = sphi 0, %s247
    %s251 = sphi 0, %s250
    %s267 = sphi 0, %s251
  $region4: #{tpu_custom_call.1} parent=0 // loop_header_branch
    %18 = sbr.rel (%p16) target = $region8
  $region5: #{tpu_custom_call.1} parent=0 // loop_body
    %s20 = ssub.s32 %s15, 1
    %s21 = ssub.s32 %s15, 2
    %s28 = sadd.s32 1, %s23
    %p29 = scmp.ge.s32.totalorder %s28, 2
    %s30 = scalar_select %p29, 0, %s28
    %s31 = sadd.s32 1, %s22
    %s32 = scalar_select %p29, %s31, %s22
    %p33 = scmp.ge.s32.totalorder %s32, 2
    %s34 = scalar_select %p33, 0, %s32
    %s35 = ssub.s32 %s22, %s34
    %s36 = ssub.s32 %s23, %s30
    %s37 = sor.u32 %s35, %s36
    %p38 = scmp.eq.s32.totalorder %s37, 0
    %s40 = sadd.s32 %s39, 1
    %s41 = scalar_select %p38, %s39, %s40
    %p44 = pneg %p38
    %p45 = scmp.eq.s32.totalorder %s15, 3
    %p46 = por %p44, %p45
    %p47 = scmp.ne.s32.totalorder %s39, %s42
    %p48 = scmp.eq.s32.totalorder %s15, 0
    %p49 = por %p47, %p48
    %p50 = scmp.ne.s32.totalorder %s39, %s42
    %p51 = scmp.eq.s32.totalorder %s20, 3
    %p52 = por %p50, %p51
    %p53 = scmp.ne.s32.totalorder %s42, %s43
    %p54 = scmp.eq.s32.totalorder %s20, 0
    %p55 = por %p53, %p54
    %p56 = scmp.ne.s32.totalorder %s42, %s43
    %p57 = scmp.eq.s32.totalorder %s21, 3
    %p58 = por %p56, %p57
    %p60 = scmp.ne.s32.totalorder %s43, %s59
    %p61 = scmp.eq.s32.totalorder %s21, 0
    %p62 = por %p60, %p61
    %s63 = ssub.s32 %s22, %s34
    %s64 = ssub.s32 %s23, %s30
    %s65 = sor.u32 %s63, %s64
    %p66 = scmp.eq.s32.totalorder %s65, 0
    %s68 = sadd.s32 %s67, 1
    %s69 = scalar_select %p66, %s67, %s68
    %p72 = pneg %p66
    %p73 = scmp.eq.s32.totalorder %s15, 3
    %p74 = por %p72, %p73
    %p75 = scmp.ne.s32.totalorder %s67, %s70
    %p76 = scmp.eq.s32.totalorder %s15, 0
    %p77 = por %p75, %p76
    %p78 = scmp.ne.s32.totalorder %s67, %s70
    %p79 = scmp.eq.s32.totalorder %s20, 3
    %p80 = por %p78, %p79
    %p81 = scmp.ne.s32.totalorder %s70, %s71
    %p82 = scmp.eq.s32.totalorder %s20, 0
    %p83 = por %p81, %p82
    %p84 = scmp.ne.s32.totalorder %s70, %s71
    %p85 = scmp.eq.s32.totalorder %s21, 3
    %p86 = por %p84, %p85
    %p88 = scmp.ne.s32.totalorder %s71, %s87
    %p89 = scmp.eq.s32.totalorder %s21, 0
    %p90 = por %p88, %p89
    %s91 = ssub.s32 %s23, %s30
    %p92 = scmp.eq.s32.totalorder %s91, 0
    %s94 = sadd.s32 %s93, 1
    %s95 = scalar_select %p92, %s93, %s94
    %p98 = pneg %p92
    %p99 = scmp.eq.s32.totalorder %s15, 3
    %p100 = por %p98, %p99
    %p101 = scmp.ne.s32.totalorder %s93, %s96
    %p102 = scmp.eq.s32.totalorder %s15, 0
    %p103 = por %p101, %p102
    %p104 = scmp.ne.s32.totalorder %s93, %s96
    %p105 = scmp.eq.s32.totalorder %s20, 3
    %p106 = por %p104, %p105
    %p107 = scmp.ne.s32.totalorder %s96, %s97
    %p108 = scmp.eq.s32.totalorder %s20, 0
    %p109 = por %p107, %p108
    %p110 = scmp.ne.s32.totalorder %s96, %s97
    %p111 = scmp.eq.s32.totalorder %s21, 3
    %p112 = por %p110, %p111
    %p114 = scmp.ne.s32.totalorder %s97, %s113
    %p115 = scmp.eq.s32.totalorder %s21, 0
    %p116 = por %p114, %p115
    %s118 = sadd.s32 %s117, 1
    %p121 = scmp.eq.s32.totalorder %s15, 3
    %p122 = scmp.ne.s32.totalorder %s117, %s119
    %p123 = scmp.eq.s32.totalorder %s15, 0
    %p124 = por %p122, %p123
    %p125 = scmp.ne.s32.totalorder %s117, %s119
    %p126 = scmp.eq.s32.totalorder %s20, 3
    %p127 = por %p125, %p126
    %p128 = scmp.ne.s32.totalorder %s119, %s120
    %p129 = scmp.eq.s32.totalorder %s20, 0
    %p130 = por %p128, %p129
    %p131 = scmp.ne.s32.totalorder %s119, %s120
    %p132 = scmp.eq.s32.totalorder %s21, 3
    %p133 = por %p131, %p132
    %p135 = scmp.ne.s32.totalorder %s120, %s134
    %p136 = scmp.eq.s32.totalorder %s21, 0
    %p137 = por %p135, %p136
    %s139 = sadd.s32 %s138, 1
    %p142 = scmp.eq.s32.totalorder %s15, 3
    %p143 = scmp.ne.s32.totalorder %s138, %s140
    %p144 = scmp.eq.s32.totalorder %s15, 0
    %p145 = por %p143, %p144
    %p146 = scmp.ne.s32.totalorder %s138, %s140
    %p147 = scmp.eq.s32.totalorder %s20, 3
    %p148 = por %p146, %p147
    %p149 = scmp.ne.s32.totalorder %s140, %s141
    %p150 = scmp.eq.s32.totalorder %s20, 0
    %p151 = por %p149, %p150
    %p152 = scmp.ne.s32.totalorder %s140, %s141
    %p153 = scmp.eq.s32.totalorder %s21, 3
    %p154 = por %p152, %p153
    %p156 = scmp.ne.s32.totalorder %s141, %s155
    %p157 = scmp.eq.s32.totalorder %s21, 0
    %p158 = por %p156, %p157
    %s160 = sadd.s32 %s159, 1
    %p163 = scmp.eq.s32.totalorder %s15, 3
    %p164 = scmp.ne.s32.totalorder %s159, %s161
    %p165 = scmp.eq.s32.totalorder %s15, 0
    %p166 = por %p164, %p165
    %p167 = scmp.ne.s32.totalorder %s159, %s161
    %p168 = scmp.eq.s32.totalorder %s20, 3
    %p169 = por %p167, %p168
    %p170 = scmp.ne.s32.totalorder %s161, %s162
    %p171 = scmp.eq.s32.totalorder %s20, 0
    %p172 = por %p170, %p171
    %p173 = scmp.ne.s32.totalorder %s161, %s162
    %p174 = scmp.eq.s32.totalorder %s21, 3
    %p175 = por %p173, %p174
    %p177 = scmp.ne.s32.totalorder %s162, %s176
    %p178 = scmp.eq.s32.totalorder %s21, 0
    %p179 = por %p177, %p178
    %s181 = sadd.s32 %s180, 1
    %p184 = scmp.eq.s32.totalorder %s15, 3
    %p185 = scmp.ne.s32.totalorder %s180, %s182
    %p186 = scmp.eq.s32.totalorder %s15, 0
    %p187 = por %p185, %p186
    %p188 = scmp.ne.s32.totalorder %s180, %s182
    %p189 = scmp.eq.s32.totalorder %s20, 3
    %p190 = por %p188, %p189
    %p191 = scmp.ne.s32.totalorder %s182, %s183
    %p192 = scmp.eq.s32.totalorder %s20, 0
    %p193 = por %p191, %p192
    %p194 = scmp.ne.s32.totalorder %s182, %s183
    %p195 = scmp.eq.s32.totalorder %s21, 3
    %p196 = por %p194, %p195
    %p198 = scmp.ne.s32.totalorder %s183, %s197
    %p199 = scmp.eq.s32.totalorder %s21, 0
    %p200 = por %p198, %p199
    %s202 = sadd.s32 %s201, 1
    %p205 = scmp.eq.s32.totalorder %s15, 3
    %p206 = scmp.ne.s32.totalorder %s201, %s203
    %p207 = scmp.eq.s32.totalorder %s15, 0
    %p208 = por %p206, %p207
    %p209 = scmp.ne.s32.totalorder %s201, %s203
    %p210 = scmp.eq.s32.totalorder %s20, 3
    %p211 = por %p209, %p210
    %p212 = scmp.ne.s32.totalorder %s203, %s204
    %p213 = scmp.eq.s32.totalorder %s20, 0
    %p214 = por %p212, %p213
    %p215 = scmp.ne.s32.totalorder %s203, %s204
    %p216 = scmp.eq.s32.totalorder %s21, 3
    %p217 = por %p215, %p216
    %p219 = scmp.ne.s32.totalorder %s204, %s218
    %p220 = scmp.eq.s32.totalorder %s21, 0
    %p221 = por %p219, %p220
    %s223 = sadd.s32 %s222, 1
    %p226 = scmp.eq.s32.totalorder %s15, 3
    %p227 = scmp.ne.s32.totalorder %s222, %s224
    %p228 = scmp.eq.s32.totalorder %s15, 0
    %p229 = por %p227, %p228
    %p230 = scmp.ne.s32.totalorder %s222, %s224
    %p231 = scmp.eq.s32.totalorder %s20, 3
    %p232 = por %p230, %p231
    %p233 = scmp.ne.s32.totalorder %s224, %s225
    %p234 = scmp.eq.s32.totalorder %s20, 0
    %p235 = por %p233, %p234
    %p236 = scmp.ne.s32.totalorder %s224, %s225
    %p237 = scmp.eq.s32.totalorder %s21, 3
    %p238 = por %p236, %p237
    %p240 = scmp.ne.s32.totalorder %s225, %s239
    %p241 = scmp.eq.s32.totalorder %s21, 0
    %p242 = por %p240, %p241
    %s243 = ssub.s32 %s22, %s34
    %s244 = ssub.s32 %s23, %s30
    %s245 = sor.u32 %s243, %s244
    %p246 = scmp.eq.s32.totalorder %s245, 0
    %s248 = sadd.s32 %s247, 1
    %s249 = scalar_select %p246, %s247, %s248
    %p252 = pneg %p246
    %p253 = scmp.eq.s32.totalorder %s15, 3
    %p254 = por %p252, %p253
    %p255 = scmp.ne.s32.totalorder %s247, %s250
    %p256 = scmp.eq.s32.totalorder %s15, 0
    %p257 = por %p255, %p256
    %p258 = scmp.ne.s32.totalorder %s247, %s250
    %p259 = scmp.eq.s32.totalorder %s20, 3
    %p260 = por %p258, %p259
    %p261 = scmp.ne.s32.totalorder %s250, %s251
    %p262 = scmp.eq.s32.totalorder %s20, 0
    %p263 = por %p261, %p262
    %p264 = scmp.ne.s32.totalorder %s250, %s251
    %p265 = scmp.eq.s32.totalorder %s21, 3
    %p266 = por %p264, %p265
    %p268 = scmp.ne.s32.totalorder %s251, %s267
    %p269 = scmp.eq.s32.totalorder %s21, 0
    %p270 = por %p268, %p269
    %p271 = scmp.le.s32.totalorder 1, %s15
    %p272 = scmp.lt.s32.totalorder %s15, 5
    %p273 = pnand %p271, %p272
    %p274 = pneg %p273
    // Predicated region
    $region9: #{tpu_custom_call.1} parent=5 // pred_check
      _
    $region10: #{tpu_custom_call.1} parent=5 // pred_check_branch
      %276 = sbr.rel (%p273) target = $region12
    $region11: #{tpu_custom_call.1} parent=5 // pred_region
      %s277 = ssub.s32 %s15, 1
      // Predicated region
      $region13: #{tpu_custom_call.1} parent=11 // pred_check
        %p278 = pneg %p130
      $region14: #{tpu_custom_call.1} parent=11 // pred_check_branch
        %280 = sbr.rel (%p278) target = $region16
      $region15: #{tpu_custom_call.1} parent=11 // pred_region
        _
      $region16: #{tpu_custom_call.1} parent=11 // pred_fallthru
        _
      // Predicated region
      $region17: #{tpu_custom_call.1} parent=11 // pred_check
        %p281 = pneg %p151
      $region18: #{tpu_custom_call.1} parent=11 // pred_check_branch
        %283 = sbr.rel (%p281) target = $region20
      $region19: #{tpu_custom_call.1} parent=11 // pred_region
        _
      $region20: #{tpu_custom_call.1} parent=11 // pred_fallthru
        _
      // Predicated region
      $region21: #{tpu_custom_call.1} parent=11 // pred_check
        %p284 = pneg %p172
      $region22: #{tpu_custom_call.1} parent=11 // pred_check_branch
        %286 = sbr.rel (%p284) target = $region24
      $region23: #{tpu_custom_call.1} parent=11 // pred_region
        _
      $region24: #{tpu_custom_call.1} parent=11 // pred_fallthru
        _
      // Predicated region
      $region25: #{tpu_custom_call.1} parent=11 // pred_check
        %p287 = pneg %p193
      $region26: #{tpu_custom_call.1} parent=11 // pred_check_branch
        %289 = sbr.rel (%p287) target = $region28
      $region27: #{tpu_custom_call.1} parent=11 // pred_region
        _
      $region28: #{tpu_custom_call.1} parent=11 // pred_fallthru
        _
      // Predicated region
      $region29: #{tpu_custom_call.1} parent=11 // pred_check
        %p290 = pneg %p214
      $region30: #{tpu_custom_call.1} parent=11 // pred_check_branch
        %292 = sbr.rel (%p290) target = $region32
      $region31: #{tpu_custom_call.1} parent=11 // pred_region
        _
      $region32: #{tpu_custom_call.1} parent=11 // pred_fallthru
        _
      // Predicated region
      $region33: #{tpu_custom_call.1} parent=11 // pred_check
        %p293 = pneg %p235
      $region34: #{tpu_custom_call.1} parent=11 // pred_check_branch
        %295 = sbr.rel (%p293) target = $region36
      $region35: #{tpu_custom_call.1} parent=11 // pred_region
        _
      $region36: #{tpu_custom_call.1} parent=11 // pred_fallthru
        _
    $region12: #{tpu_custom_call.1} parent=5 // pred_fallthru
      _
    %p296 = scmp.lt.s32.totalorder %s15, 4
    // Predicated region
    $region37: #{tpu_custom_call.1} parent=5 // pred_check
      %p297 = pneg %p296
    $region38: #{tpu_custom_call.1} parent=5 // pred_check_branch
      %299 = sbr.rel (%p297) target = $region40
    $region39: #{tpu_custom_call.1} parent=5 // pred_region
      // Predicated region
      $region41: #{tpu_custom_call.1} parent=39 // pred_check
        %p300 = pneg %p49
      $region42: #{tpu_custom_call.1} parent=39 // pred_check_branch
        %302 = sbr.rel (%p300) target = $region44
      $region43: #{tpu_custom_call.1} parent=39 // pred_region
        %s303 = smul.u32 16, %s23
        %p304 = scmp.lt.s32.totalorder %s22, 1
        %s305 = scalar_select %p304, %s22, 1
        %p306 = scmp.lt.s32.totalorder %s303, 31
        %s307 = scalar_select %p306, %s303, 31
        %s308 = smul.addr %s305, 32
        %s309 = sadd.s32 %s307, %s308
        %s310 = smul.addr %s309, 8
        %s311 = scalar_lea.vmem %s0, %s310
        %s312 = smul.u32 16, %s23
      $region44: #{tpu_custom_call.1} parent=39 // pred_fallthru
        _
      // Predicated region
      $region45: #{tpu_custom_call.1} parent=39 // pred_check
        %p313 = pneg %p77
      $region46: #{tpu_custom_call.1} parent=39 // pred_check_branch
        %315 = sbr.rel (%p313) target = $region48
      $region47: #{tpu_custom_call.1} parent=39 // pred_region
        %p316 = scmp.lt.s32.totalorder %s22, 1
        %s317 = scalar_select %p316, %s22, 1
        %p318 = scmp.lt.s32.totalorder %s23, 1
        %s319 = scalar_select %p318, %s23, 1
        %s320 = smul.addr %s319, 30
        %s321 = smul.addr %s317, 60
        %s322 = sadd.s32 %s320, %s321
        %s323 = smul.addr %s322, 4
        %s324 = scalar_lea.vmem %s1, %s323
      $region48: #{tpu_custom_call.1} parent=39 // pred_fallthru
        _
      // Predicated region
      $region49: #{tpu_custom_call.1} parent=39 // pred_check
        %p325 = pneg %p103
      $region50: #{tpu_custom_call.1} parent=39 // pred_check_branch
        %327 = sbr.rel (%p325) target = $region52
      $region51: #{tpu_custom_call.1} parent=39 // pred_region
        %p328 = scmp.lt.s32.totalorder %s23, 1
        %s329 = scalar_select %p328, %s23, 1
        %s330 = smul.addr %s329, 30
        %s331 = smul.addr %s330, 8
        %s332 = scalar_lea.vmem %s2, %s331
      $region52: #{tpu_custom_call.1} parent=39 // pred_fallthru
        _
    $region40: #{tpu_custom_call.1} parent=5 // pred_fallthru
      _
    %p333 = scmp.le.s32.totalorder 1, %s15
    %p334 = scmp.lt.s32.totalorder %s15, 5
    %p335 = pnand %p333, %p334
    %p336 = pneg %p335
    // Predicated region
    $region53: #{tpu_custom_call.1} parent=5 // pred_check
      _
    $region54: #{tpu_custom_call.1} parent=5 // pred_check_branch
      %338 = sbr.rel (%p335) target = $region56
    $region55: #{tpu_custom_call.1} parent=5 // pred_region
      %s339 = ssub.s32 %s15, 1
      %s340 = smul.u32 16, %s25
      %p341 = scmp.lt.s32.totalorder %s24, 1
      %s342 = scalar_select %p341, %s24, 1
      %p343 = scmp.lt.s32.totalorder %s340, 31
      %s344 = scalar_select %p343, %s340, 31
      %s345 = smul.addr %s342, 32
      %s346 = sadd.s32 %s344, %s345
      %s347 = smul.addr %s346, 8
      %s348 = scalar_lea.vmem %s0, %s347
      %p349 = pneg %p55
      %p350 = pneg %p52
      %p351 = scmp.lt.s32.totalorder %s24, 1
      %s352 = scalar_select %p351, %s24, 1
      %p353 = scmp.lt.s32.totalorder %s25, 1
      %s354 = scalar_select %p353, %s25, 1
      %s355 = smul.addr %s354, 30
      %s356 = smul.addr %s352, 60
      %s357 = sadd.s32 %s355, %s356
      %s358 = smul.addr %s357, 4
      %s359 = scalar_lea.vmem %s1, %s358
      %p360 = pneg %p83
      %p361 = pneg %p80
      %p362 = scmp.lt.s32.totalorder %s25, 1
      %s363 = scalar_select %p362, %s25, 1
      %s364 = smul.addr %s363, 30
      %s365 = smul.addr %s364, 8
      %s366 = scalar_lea.vmem %s2, %s365
      %p367 = pneg %p109
      %p368 = pneg %p106
      %p369 = pneg %p130
      %p370 = pneg %p127
      %p371 = pneg %p151
      %p372 = pneg %p148
      %p373 = pneg %p172
      %p374 = pneg %p169
      %p375 = pneg %p193
      %p376 = pneg %p190
      %p377 = pneg %p214
      %p378 = pneg %p211
      %p379 = pneg %p235
      %p380 = pneg %p232
      %p381 = pneg %p263
      %p382 = pneg %p260
      %s383 = smul.u32 16, %s25
      %p384 = scmp.lt.s32.totalorder %s24, 1
      %s385 = scalar_select %p384, %s24, 1
      %p386 = scmp.lt.s32.totalorder %s383, 31
      %s387 = scalar_select %p386, %s383, 31
      %s388 = smul.addr %s385, 32
      %s389 = sadd.s32 %s387, %s388
      %s390 = smul.addr %s389, 8
      %s391 = scalar_lea.vmem %s9, %s390
      %s392 = smul.u32 16, %s25
      %p393 = scmp.lt.s32.totalorder %s24, 1
      %s394 = scalar_select %p393, %s24, 1
      %p395 = scmp.lt.s32.totalorder %s392, 31
      %s396 = scalar_select %p395, %s392, 31
      %s397 = smul.addr %s394, 32
      %s398 = sadd.s32 %s396, %s397
      %s399 = smul.addr %s398, 8
      %s400 = scalar_lea.vmem %s0, %s399
      %s401 = smul.u32 16, %s25
      %p402 = scmp.lt.s32.totalorder %s24, 1
      %s403 = scalar_select %p402, %s24, 1
      %p404 = scmp.lt.s32.totalorder %s25, 1
      %s405 = scalar_select %p404, %s25, 1
      %s406 = smul.addr %s405, 30
      %s407 = smul.addr %s403, 60
      %s408 = sadd.s32 %s406, %s407
      %s409 = smul.addr %s408, 4
      %s410 = scalar_lea.vmem %s1, %s409
      %p411 = scmp.lt.s32.totalorder %s25, 1
      %s412 = scalar_select %p411, %s25, 1
      %s413 = smul.addr %s412, 30
      %s414 = smul.addr %s413, 8
      %s415 = scalar_lea.vmem %s2, %s414
      %s416 = smul.u32 16, %s25
      %p417 = scmp.lt.s32.totalorder %s24, 1
      %s418 = scalar_select %p417, %s24, 1
      %p419 = scmp.lt.s32.totalorder %s416, 31
      %s420 = scalar_select %p419, %s416, 31
      %s421 = smul.addr %s418, 32
      %s422 = sadd.s32 %s420, %s421
      %s423 = smul.addr %s422, 8
      %s424 = scalar_lea.vmem %s9, %s423
      %s425 = smul.u32 16, %s25
      %v427 = vld [vmem:[%s410] sm:$0xf]
      %v428 = vld [vmem:[%s410 + $0x4] sm:$0xf]
      %v429 = vld [vmem:[%s410 + $0x8] sm:$0xf]
      %v430 = vld [vmem:[%s410 + $0xc] sm:$0xf]
      %v431 = vld [vmem:[%s410 + $0x10] sm:$0xf]
      %v432 = vld [vmem:[%s410 + $0x14] sm:$0xf]
      %v433 = vld [vmem:[%s410 + $0x18] sm:$0xf]
      %v434 = vld [vmem:[%s410 + $0x1c] sm:$0xf]
      %v435 = vld [vmem:[%s410 + $0x20] sm:$0xf]
      %v436 = vld [vmem:[%s410 + $0x24] sm:$0xf]
      %v437 = vld [vmem:[%s410 + $0x28] sm:$0xf]
      %v438 = vld [vmem:[%s410 + $0x2c] sm:$0xf]
      %v439 = vld [vmem:[%s410 + $0x30] sm:$0xf]
      %v440 = vld [vmem:[%s410 + $0x34] sm:$0xf]
      %v441 = vld [vmem:[%s410 + $0x38] sm:$0xf]
      %v442 = vld [vmem:[%s410 + $0x3c] sm:$0xf]
      %v443 = vld [vmem:[%s410 + $0x40] sm:$0xf]
      %v444 = vld [vmem:[%s410 + $0x44] sm:$0xf]
      %v445 = vld [vmem:[%s410 + $0x48] sm:$0xf]
      %v446 = vld [vmem:[%s410 + $0x4c] sm:$0xf]
      %v447 = vld [vmem:[%s410 + $0x50] sm:$0xf]
      %v448 = vld [vmem:[%s410 + $0x54] sm:$0xf]
      %v449 = vld [vmem:[%s410 + $0x58] sm:$0xf]
      %v450 = vld [vmem:[%s410 + $0x5c] sm:$0xf]
      %v451 = vld [vmem:[%s410 + $0x60] sm:$0xf]
      %v452 = vld [vmem:[%s410 + $0x64] sm:$0xf]
      %v453 = vld [vmem:[%s410 + $0x68] sm:$0xf]
      %v454 = vld [vmem:[%s410 + $0x6c] sm:$0xf]
      %v455 = vld [vmem:[%s410 + $0x70] sm:$0xf]
      %v456 = vld [vmem:[%s410 + $0x74] sm:$0xf]
      %v457 = vld [vmem:[%s3] sm:$0xf]
      %v458 = vld [vmem:[%s3 + $0x4] sm:$0xf]
      %v459 = vld [vmem:[%s3 + $0x8] sm:$0xf]
      %v460 = vld [vmem:[%s3 + $0xc] sm:$0xf]
      %v461 = vld [vmem:[%s3 + $0x10] sm:$0x3]
      %v462 = vld [vmem:[%s4] sm:$0x1]
      %v464 = vlaneseq
      %v465 = vshrl.u32 %v464, 7
      %v466 = vsub.s32 0, %v465
      %v467 = vrot.slane %v462, %v466
      %v499 = vunpack.c.l.b16 %v427
      %v500 = vunpack.c.l.b16 %v428
      %v501 = vunpack.c.l.b16 %v429
      %v502 = vunpack.c.l.b16 %v430
      %v503 = vunpack.c.l.b16 %v431
      %v504 = vunpack.c.l.b16 %v432
      %v505 = vunpack.c.l.b16 %v433
      %v506 = vunpack.c.l.b16 %v434
      %v507 = vunpack.c.l.b16 %v435
      %v508 = vunpack.c.l.b16 %v436
      %v509 = vunpack.c.l.b16 %v437
      %v510 = vunpack.c.l.b16 %v438
      %v511 = vunpack.c.l.b16 %v439
      %v512 = vunpack.c.l.b16 %v440
      %v513 = vunpack.c.l.b16 %v441
      %v514 = vunpack.c.l.b16 %v442
      %v515 = vunpack.c.l.b16 %v443
      %v516 = vunpack.c.l.b16 %v444
      %v517 = vunpack.c.l.b16 %v445
      %v518 = vunpack.c.l.b16 %v446
      %v519 = vunpack.c.l.b16 %v447
      %v520 = vunpack.c.l.b16 %v448
      %v521 = vunpack.c.l.b16 %v449
      %v522 = vunpack.c.l.b16 %v450
      %v523 = vunpack.c.l.b16 %v451
      %v524 = vunpack.c.l.b16 %v452
      %v525 = vunpack.c.l.b16 %v453
      %v526 = vunpack.c.l.b16 %v454
      %v527 = vunpack.c.l.b16 %v455
      %v528 = vunpack.c.l.b16 %v456
      %v529 = vpack.c.b16 %v500, %v499
      %v530 = vpack.c.b16 %v502, %v501
      %v531 = vpack.c.b16 %v504, %v503
      %v532 = vpack.c.b16 %v506, %v505
      %v533 = vpack.c.b16 %v508, %v507
      %v534 = vpack.c.b16 %v510, %v509
      %v535 = vpack.c.b16 %v512, %v511
      %v536 = vpack.c.b16 %v514, %v513
      %v537 = vpack.c.b16 %v516, %v515
      %v538 = vpack.c.b16 %v518, %v517
      %v539 = vpack.c.b16 %v520, %v519
      %v540 = vpack.c.b16 %v522, %v521
      %v541 = vpack.c.b16 %v524, %v523
      %v542 = vpack.c.b16 %v526, %v525
      %v543 = vpack.c.b16 %v528, %v527
      %v549 = vunpack.c.l.b16 %v457
      %v550 = vunpack.c.l.b16 %v458
      %v551 = vunpack.c.l.b16 %v459
      %v552 = vunpack.c.l.b16 %v460
      %v553 = vunpack.c.l.b16 %v461
      %v554 = vpack.c.b16 %v550, %v549
      %v555 = vpack.c.b16 %v552, %v551
      %v556 = vpack.c.b16 %v553, %v553
      %vm559 = vcmask 293888
      %v561 = vsel %vm559, %v529, 0
      %v564 = vsel %vm559, %v530, 0
      %v567 = vsel %vm559, %v531, 0
      %v570 = vsel %vm559, %v532, 0
      %v573 = vsel %vm559, %v533, 0
      %v576 = vsel %vm559, %v534, 0
      %v579 = vsel %vm559, %v535, 0
      %v582 = vsel %vm559, %v536, 0
      %v585 = vsel %vm559, %v537, 0
      %v588 = vsel %vm559, %v538, 0
      %v591 = vsel %vm559, %v539, 0
      %v594 = vsel %vm559, %v540, 0
      %v597 = vsel %vm559, %v541, 0
      %v600 = vsel %vm559, %v542, 0
      %v603 = vsel %vm559, %v543, 0
      %vm605 = vcmask 1041408
      %v607 = vsel %vm605, %v556, 0
      %609 = vmatprep.subr.bf16.mxu0 0
      %610 = vmatpush1.bf16.msra.mxu0 0
      %611 = vmatprep.subr.bf16.mxu0 0
      %612 = vmatpush1.bf16.msra.mxu0 0
      %613 = vmatprep.subr.bf16.mxu0 0
      %614 = vmatpush1.bf16.msra.mxu0 0
      %615 = vmatprep.subr.bf16.mxu0 0
      %616 = vmatpush1.bf16.msra.mxu0 0
      %617 = vmatprep.subr.bf16.mxu0 0
      %618 = vmatpush1.bf16.msra.mxu0 0
      %619 = vmatprep.subr.bf16.mxu0 0
      %620 = vmatpush1.bf16.msra.mxu0 %v607
      %621 = vmatprep.subr.bf16.mxu0 0
      %622 = vmatpush1.bf16.msra.mxu0 %v555
      %623 = vmatprep.subr.bf16.mxu0 0
      %624 = vmatpush1.bf16.msra.mxu0 %v554
      %625 = vmatprep.subr.bf16.mxu0 0
      %626 = vmatpush2.bf16.msra.mxu0 0
      %627 = vmatprep.subr.bf16.mxu0 0
      %628 = vmatpush2.bf16.msra.mxu0 0
      %629 = vmatprep.subr.bf16.mxu0 0
      %630 = vmatpush2.bf16.msra.mxu0 0
      %631 = vmatprep.subr.bf16.mxu0 0
      %632 = vmatpush2.bf16.msra.mxu0 0
      %633 = vmatprep.subr.bf16.mxu0 0
      %634 = vmatpush2.bf16.msra.mxu0 0
      %635 = vmatprep.subr.bf16.mxu0 0
      %636 = vmatpush2.bf16.msra.mxu0 0
      %637 = vmatprep.subr.bf16.mxu0 0
      %638 = vmatpush2.bf16.msra.mxu0 0
      %639 = vmatprep.subr.bf16.mxu0 0
      %640 = vmatpush2.bf16.msra.mxu0 0
      %641 = vmatprep.mubr.bf16.mxu0 0
      %642 = vmatmul.mubr.bf16.gmra.mxu0 %v561
      %v643 = vpop.f32.mrf.mxu0
      %v644 = vadd.f32 %v467, %v643
      %v645 = vpop.f32.mrf.mxu0
      %v646 = vpop.f32.mrf.mxu0
      %v647 = vadd.f32 %v467, %v646
      %v648 = vpop.f32.mrf.mxu0
      %649 = vmatprep.mubr.bf16.mxu0 0
      %650 = vmatmul.mubr.bf16.gmra.mxu0 %v564
      %v651 = vpop.f32.mrf.mxu0
      %v652 = vadd.f32 %v467, %v651
      %v653 = vpop.f32.mrf.mxu0
      %v654 = vpop.f32.mrf.mxu0
      %v655 = vadd.f32 %v467, %v654
      %v656 = vpop.f32.mrf.mxu0
      %657 = vmatprep.mubr.bf16.mxu0 0
      %658 = vmatmul.mubr.bf16.gmra.mxu0 %v567
      %v659 = vpop.f32.mrf.mxu0
      %v660 = vadd.f32 %v467, %v659
      %v661 = vpop.f32.mrf.mxu0
      %v662 = vpop.f32.mrf.mxu0
      %v663 = vadd.f32 %v467, %v662
      %v664 = vpop.f32.mrf.mxu0
      %665 = vmatprep.mubr.bf16.mxu0 0
      %666 = vmatmul.mubr.bf16.gmra.mxu0 %v570
      %v667 = vpop.f32.mrf.mxu0
      %v668 = vadd.f32 %v467, %v667
      %v669 = vpop.f32.mrf.mxu0
      %v670 = vpop.f32.mrf.mxu0
      %v671 = vadd.f32 %v467, %v670
      %v672 = vpop.f32.mrf.mxu0
      %673 = vmatprep.mubr.bf16.mxu0 0
      %674 = vmatmul.mubr.bf16.gmra.mxu0 %v573
      %v675 = vpop.f32.mrf.mxu0
      %v676 = vadd.f32 %v467, %v675
      %v677 = vpop.f32.mrf.mxu0
      %v678 = vpop.f32.mrf.mxu0
      %v679 = vadd.f32 %v467, %v678
      %v680 = vpop.f32.mrf.mxu0
      %681 = vmatprep.mubr.bf16.mxu0 0
      %682 = vmatmul.mubr.bf16.gmra.mxu0 %v576
      %v683 = vpop.f32.mrf.mxu0
      %v684 = vadd.f32 %v467, %v683
      %v685 = vpop.f32.mrf.mxu0
      %v686 = vpop.f32.mrf.mxu0
      %v687 = vadd.f32 %v467, %v686
      %v688 = vpop.f32.mrf.mxu0
      %689 = vmatprep.mubr.bf16.mxu0 0
      %690 = vmatmul.mubr.bf16.gmra.mxu0 %v579
      %v691 = vpop.f32.mrf.mxu0
      %v692 = vadd.f32 %v467, %v691
      %v693 = vpop.f32.mrf.mxu0
      %v694 = vpop.f32.mrf.mxu0
      %v695 = vadd.f32 %v467, %v694
      %v696 = vpop.f32.mrf.mxu0
      %697 = vmatprep.mubr.bf16.mxu0 0
      %698 = vmatmul.mubr.bf16.gmra.mxu0 %v582
      %v699 = vpop.f32.mrf.mxu0
      %v700 = vadd.f32 %v467, %v699
      %v701 = vpop.f32.mrf.mxu0
      %v702 = vpop.f32.mrf.mxu0
      %v703 = vadd.f32 %v467, %v702
      %v704 = vpop.f32.mrf.mxu0
      %705 = vmatprep.mubr.bf16.mxu0 0
      %706 = vmatmul.mubr.bf16.gmra.mxu0 %v585
      %v707 = vpop.f32.mrf.mxu0
      %v708 = vadd.f32 %v467, %v707
      %v709 = vpop.f32.mrf.mxu0
      %v710 = vpop.f32.mrf.mxu0
      %v711 = vadd.f32 %v467, %v710
      %v712 = vpop.f32.mrf.mxu0
      %713 = vmatprep.mubr.bf16.mxu0 0
      %714 = vmatmul.mubr.bf16.gmra.mxu0 %v588
      %v715 = vpop.f32.mrf.mxu0
      %v716 = vadd.f32 %v467, %v715
      %v717 = vpop.f32.mrf.mxu0
      %v718 = vpop.f32.mrf.mxu0
      %v719 = vadd.f32 %v467, %v718
      %v720 = vpop.f32.mrf.mxu0
      %721 = vmatprep.mubr.bf16.mxu0 0
      %722 = vmatmul.mubr.bf16.gmra.mxu0 %v591
      %v723 = vpop.f32.mrf.mxu0
      %v724 = vadd.f32 %v467, %v723
      %v725 = vpop.f32.mrf.mxu0
      %v726 = vpop.f32.mrf.mxu0
      %v727 = vadd.f32 %v467, %v726
      %v728 = vpop.f32.mrf.mxu0
      %729 = vmatprep.mubr.bf16.mxu0 0
      %730 = vmatmul.mubr.bf16.gmra.mxu0 %v594
      %v731 = vpop.f32.mrf.mxu0
      %v732 = vadd.f32 %v467, %v731
      %v733 = vpop.f32.mrf.mxu0
      %v734 = vpop.f32.mrf.mxu0
      %v735 = vadd.f32 %v467, %v734
      %v736 = vpop.f32.mrf.mxu0
      %737 = vmatprep.mubr.bf16.mxu0 0
      %738 = vmatmul.mubr.bf16.gmra.mxu0 %v597
      %v739 = vpop.f32.mrf.mxu0
      %v740 = vadd.f32 %v467, %v739
      %v741 = vpop.f32.mrf.mxu0
      %v742 = vpop.f32.mrf.mxu0
      %v743 = vadd.f32 %v467, %v742
      %v744 = vpop.f32.mrf.mxu0
      %745 = vmatprep.mubr.bf16.mxu0 0
      %746 = vmatmul.mubr.bf16.gmra.mxu0 %v600
      %v747 = vpop.f32.mrf.mxu0
      %v748 = vadd.f32 %v467, %v747
      %v749 = vpop.f32.mrf.mxu0
      %v750 = vpop.f32.mrf.mxu0
      %v751 = vadd.f32 %v467, %v750
      %v752 = vpop.f32.mrf.mxu0
      %753 = vmatprep.mubr.bf16.mxu0 0
      %754 = vmatmul.mubr.bf16.gmra.mxu0 %v603
      %v755 = vpop.f32.mrf.mxu0
      %v756 = vadd.f32 %v467, %v755
      %v757 = vpop.f32.mrf.mxu0
      %v758 = vpop.f32.mrf.mxu0
      %v759 = vadd.f32 %v467, %v758
      %v760 = vpop.f32.mrf.mxu0
      %761 = vdwg.mxu0
      %v762 = vmax.f32 %v644, 0.0
      %v763 = vmax.f32 %v647, 0.0
      %v764 = vmax.f32 %v652, 0.0
      %v765 = vmax.f32 %v655, 0.0
      %v766 = vmax.f32 %v660, 0.0
      %v767 = vmax.f32 %v663, 0.0
      %v768 = vmax.f32 %v668, 0.0
      %v769 = vmax.f32 %v671, 0.0
      %v770 = vmax.f32 %v676, 0.0
      %v771 = vmax.f32 %v679, 0.0
      %v772 = vmax.f32 %v684, 0.0
      %v773 = vmax.f32 %v687, 0.0
      %v774 = vmax.f32 %v692, 0.0
      %v775 = vmax.f32 %v695, 0.0
      %v776 = vmax.f32 %v700, 0.0
      %v777 = vmax.f32 %v703, 0.0
      %v778 = vmax.f32 %v708, 0.0
      %v779 = vmax.f32 %v711, 0.0
      %v780 = vmax.f32 %v716, 0.0
      %v781 = vmax.f32 %v719, 0.0
      %v782 = vmax.f32 %v724, 0.0
      %v783 = vmax.f32 %v727, 0.0
      %v784 = vmax.f32 %v732, 0.0
      %v785 = vmax.f32 %v735, 0.0
      %v786 = vmax.f32 %v740, 0.0
      %v787 = vmax.f32 %v743, 0.0
      %v788 = vmax.f32 %v748, 0.0
      %v789 = vmax.f32 %v751, 0.0
      %v790 = vmax.f32 %v756, 0.0
      %v791 = vmax.f32 %v759, 0.0
      %v792 = vld [vmem:[%s415] sm:$0xff]
      %v793 = vld [vmem:[%s415 + $0x8] sm:$0xff]
      %v794 = vld [vmem:[%s415 + $0x10] sm:$0xff]
      %v795 = vld [vmem:[%s415 + $0x18] sm:$0xff]
      %v796 = vld [vmem:[%s415 + $0x20] sm:$0xff]
      %v797 = vld [vmem:[%s415 + $0x28] sm:$0xff]
      %v798 = vld [vmem:[%s415 + $0x30] sm:$0xff]
      %v799 = vld [vmem:[%s415 + $0x38] sm:$0xff]
      %v800 = vld [vmem:[%s415 + $0x40] sm:$0xff]
      %v801 = vld [vmem:[%s415 + $0x48] sm:$0xff]
      %v802 = vld [vmem:[%s415 + $0x50] sm:$0xff]
      %v803 = vld [vmem:[%s415 + $0x58] sm:$0xff]
      %v804 = vld [vmem:[%s415 + $0x60] sm:$0xff]
      %v805 = vld [vmem:[%s415 + $0x68] sm:$0xff]
      %v806 = vld [vmem:[%s415 + $0x70] sm:$0xff]
      %v807 = vld [vmem:[%s415 + $0x78] sm:$0xff]
      %v808 = vld [vmem:[%s415 + $0x80] sm:$0xff]
      %v809 = vld [vmem:[%s415 + $0x88] sm:$0xff]
      %v810 = vld [vmem:[%s415 + $0x90] sm:$0xff]
      %v811 = vld [vmem:[%s415 + $0x98] sm:$0xff]
      %v812 = vld [vmem:[%s415 + $0xa0] sm:$0xff]
      %v813 = vld [vmem:[%s415 + $0xa8] sm:$0xff]
      %v814 = vld [vmem:[%s415 + $0xb0] sm:$0xff]
      %v815 = vld [vmem:[%s415 + $0xb8] sm:$0xff]
      %v816 = vld [vmem:[%s415 + $0xc0] sm:$0xff]
      %v817 = vld [vmem:[%s415 + $0xc8] sm:$0xff]
      %v818 = vld [vmem:[%s415 + $0xd0] sm:$0xff]
      %v819 = vld [vmem:[%s415 + $0xd8] sm:$0xff]
      %v820 = vld [vmem:[%s415 + $0xe0] sm:$0xff]
      %v821 = vld [vmem:[%s415 + $0xe8] sm:$0xff]
      %823 = vset.pattern.permute.xlu0 0
      %824 = vperm.xlu0 %823, %v792
      %v825 = vpop.permute.xlu0 %824
      %828 = vset.pattern.permute.xlu0 0
      %829 = vperm.xlu0 %828, %v793
      %v830 = vpop.permute.xlu0 %829
      %833 = vset.pattern.permute.xlu0 0
      %834 = vperm.xlu0 %833, %v794
      %v835 = vpop.permute.xlu0 %834
      %838 = vset.pattern.permute.xlu0 0
      %839 = vperm.xlu0 %838, %v795
      %v840 = vpop.permute.xlu0 %839
      %843 = vset.pattern.permute.xlu0 0
      %844 = vperm.xlu0 %843, %v796
      %v845 = vpop.permute.xlu0 %844
      %848 = vset.pattern.permute.xlu0 0
      %849 = vperm.xlu0 %848, %v797
      %v850 = vpop.permute.xlu0 %849
      %853 = vset.pattern.permute.xlu0 0
      %854 = vperm.xlu0 %853, %v798
      %v855 = vpop.permute.xlu0 %854
      %858 = vset.pattern.permute.xlu0 0
      %859 = vperm.xlu0 %858, %v799
      %v860 = vpop.permute.xlu0 %859
      %863 = vset.pattern.permute.xlu0 0
      %864 = vperm.xlu0 %863, %v800
      %v865 = vpop.permute.xlu0 %864
      %868 = vset.pattern.permute.xlu0 0
      %869 = vperm.xlu0 %868, %v801
      %v870 = vpop.permute.xlu0 %869
      %873 = vset.pattern.permute.xlu0 0
      %874 = vperm.xlu0 %873, %v802
      %v875 = vpop.permute.xlu0 %874
      %878 = vset.pattern.permute.xlu0 0
      %879 = vperm.xlu0 %878, %v803
      %v880 = vpop.permute.xlu0 %879
      %883 = vset.pattern.permute.xlu0 0
      %884 = vperm.xlu0 %883, %v804
      %v885 = vpop.permute.xlu0 %884
      %888 = vset.pattern.permute.xlu0 0
      %889 = vperm.xlu0 %888, %v805
      %v890 = vpop.permute.xlu0 %889
      %893 = vset.pattern.permute.xlu0 0
      %894 = vperm.xlu0 %893, %v806
      %v895 = vpop.permute.xlu0 %894
      %898 = vset.pattern.permute.xlu0 0
      %899 = vperm.xlu0 %898, %v807
      %v900 = vpop.permute.xlu0 %899
      %903 = vset.pattern.permute.xlu0 0
      %904 = vperm.xlu0 %903, %v808
      %v905 = vpop.permute.xlu0 %904
      %908 = vset.pattern.permute.xlu0 0
      %909 = vperm.xlu0 %908, %v809
      %v910 = vpop.permute.xlu0 %909
      %913 = vset.pattern.permute.xlu0 0
      %914 = vperm.xlu0 %913, %v810
      %v915 = vpop.permute.xlu0 %914
      %918 = vset.pattern.permute.xlu0 0
      %919 = vperm.xlu0 %918, %v811
      %v920 = vpop.permute.xlu0 %919
      %923 = vset.pattern.permute.xlu0 0
      %924 = vperm.xlu0 %923, %v812
      %v925 = vpop.permute.xlu0 %924
      %928 = vset.pattern.permute.xlu0 0
      %929 = vperm.xlu0 %928, %v813
      %v930 = vpop.permute.xlu0 %929
      %933 = vset.pattern.permute.xlu0 0
      %934 = vperm.xlu0 %933, %v814
      %v935 = vpop.permute.xlu0 %934
      %938 = vset.pattern.permute.xlu0 0
      %939 = vperm.xlu0 %938, %v815
      %v940 = vpop.permute.xlu0 %939
      %943 = vset.pattern.permute.xlu0 0
      %944 = vperm.xlu0 %943, %v816
      %v945 = vpop.permute.xlu0 %944
      %948 = vset.pattern.permute.xlu0 0
      %949 = vperm.xlu0 %948, %v817
      %v950 = vpop.permute.xlu0 %949
      %953 = vset.pattern.permute.xlu0 0
      %954 = vperm.xlu0 %953, %v818
      %v955 = vpop.permute.xlu0 %954
      %958 = vset.pattern.permute.xlu0 0
      %959 = vperm.xlu0 %958, %v819
      %v960 = vpop.permute.xlu0 %959
      %963 = vset.pattern.permute.xlu0 0
      %964 = vperm.xlu0 %963, %v820
      %v965 = vpop.permute.xlu0 %964
      %968 = vset.pattern.permute.xlu0 0
      %969 = vperm.xlu0 %968, %v821
      %v970 = vpop.permute.xlu0 %969
      %v972 = vmul.f32 %v762, %v825
      %v973 = vmul.f32 %v763, %v830
      %v974 = vmul.f32 %v764, %v835
      %v975 = vmul.f32 %v765, %v840
      %v976 = vmul.f32 %v766, %v845
      %v977 = vmul.f32 %v767, %v850
      %v978 = vmul.f32 %v768, %v855
      %v979 = vmul.f32 %v769, %v860
      %v980 = vmul.f32 %v770, %v865
      %v981 = vmul.f32 %v771, %v870
      %v982 = vmul.f32 %v772, %v875
      %v983 = vmul.f32 %v773, %v880
      %v984 = vmul.f32 %v774, %v885
      %v985 = vmul.f32 %v775, %v890
      %v986 = vmul.f32 %v776, %v895
      %v987 = vmul.f32 %v777, %v900
      %v988 = vmul.f32 %v778, %v905
      %v989 = vmul.f32 %v779, %v910
      %v990 = vmul.f32 %v780, %v915
      %v991 = vmul.f32 %v781, %v920
      %v992 = vmul.f32 %v782, %v925
      %v993 = vmul.f32 %v783, %v930
      %v994 = vmul.f32 %v784, %v935
      %v995 = vmul.f32 %v785, %v940
      %v996 = vmul.f32 %v786, %v945
      %v997 = vmul.f32 %v787, %v950
      %v998 = vmul.f32 %v788, %v955
      %v999 = vmul.f32 %v789, %v960
      %v1000 = vmul.f32 %v790, %v965
      %v1001 = vmul.f32 %v791, %v970
      %v1002 = vpack.c.bf16 %v973, %v972
      %v1003 = vpack.c.bf16 %v976, %v975
      %v1004 = vpack.c.bf16 %v979, %v978
      %v1005 = vpack.c.bf16 %v982, %v981
      %v1006 = vpack.c.bf16 %v985, %v984
      %v1007 = vpack.c.bf16 %v988, %v987
      %v1008 = vpack.c.bf16 %v991, %v990
      %v1009 = vpack.c.bf16 %v994, %v993
      %v1010 = vld [vmem:[%s5] sm:$0xf]
      %v1011 = vld [vmem:[%s5 + $0x4] sm:$0xf]
      %v1012 = vld [vmem:[%s5 + $0x8] sm:$0xf]
      %v1013 = vld [vmem:[%s5 + $0xc] sm:$0xf]
      %v1014 = vld [vmem:[%s5 + $0x10] sm:$0xf]
      %v1015 = vld [vmem:[%s5 + $0x14] sm:$0xf]
      %v1016 = vld [vmem:[%s5 + $0x18] sm:$0xf]
      %v1017 = vld [vmem:[%s5 + $0x1c] sm:$0xf]
      %v1018 = vld [vmem:[%s5 + $0x20] sm:$0xf]
      %v1019 = vld [vmem:[%s5 + $0x24] sm:$0xf]
      %v1020 = vld [vmem:[%s5 + $0x28] sm:$0xf]
      %v1021 = vld [vmem:[%s5 + $0x2c] sm:$0xf]
      %v1022 = vld [vmem:[%s5 + $0x30] sm:$0xf]
      %v1023 = vld [vmem:[%s5 + $0x34] sm:$0xf]
      %v1024 = vld [vmem:[%s5 + $0x38] sm:$0xf]
      %v1025 = vld [vmem:[%s5 + $0x3c] sm:$0xf]
      %v1026 = vpack.c.bf16 %v997, %v996
      %s1027 = scalar_lea.vmem %s5, 192
      %v1028 = vld [vmem:[%s1027] sm:$0xf]
      %v1029 = vld [vmem:[%s1027 + $0x4] sm:$0xf]
      %v1030 = vld [vmem:[%s1027 + $0x8] sm:$0xf]
      %v1031 = vld [vmem:[%s1027 + $0xc] sm:$0xf]
      %v1032 = vld [vmem:[%s1027 + $0x10] sm:$0xf]
      %v1033 = vld [vmem:[%s1027 + $0x14] sm:$0xf]
      %v1034 = vld [vmem:[%s1027 + $0x18] sm:$0xf]
      %v1035 = vld [vmem:[%s1027 + $0x1c] sm:$0xf]
      %v1036 = vld [vmem:[%s1027 + $0x20] sm:$0xf]
      %v1037 = vld [vmem:[%s1027 + $0x24] sm:$0xf]
      %v1038 = vld [vmem:[%s1027 + $0x28] sm:$0xf]
      %v1039 = vld [vmem:[%s1027 + $0x2c] sm:$0xf]
      %v1040 = vld [vmem:[%s1027 + $0x30] sm:$0xf]
      %v1041 = vld [vmem:[%s1027 + $0x34] sm:$0xf]
      %v1042 = vld [vmem:[%s1027 + $0x38] sm:$0xf]
      %v1043 = vld [vmem:[%s1027 + $0x3c] sm:$0xf]
      %v1060 = vunpack.c.l.b16 %v1028
      %v1061 = vunpack.c.l.b16 %v1029
      %v1062 = vunpack.c.l.b16 %v1030
      %v1063 = vunpack.c.l.b16 %v1031
      %v1064 = vunpack.c.l.b16 %v1032
      %v1065 = vunpack.c.l.b16 %v1033
      %v1066 = vunpack.c.l.b16 %v1034
      %v1067 = vunpack.c.l.b16 %v1035
      %v1068 = vunpack.c.l.b16 %v1036
      %v1069 = vunpack.c.l.b16 %v1037
      %v1070 = vunpack.c.l.b16 %v1038
      %v1071 = vunpack.c.l.b16 %v1039
      %v1072 = vunpack.c.l.b16 %v1040
      %v1073 = vunpack.c.l.b16 %v1041
      %v1074 = vunpack.c.l.b16 %v1042
      %v1075 = vunpack.c.l.b16 %v1043
      %v1076 = vpack.c.b16 %v1061, %v1060
      %v1077 = vpack.c.b16 %v1063, %v1062
      %v1078 = vpack.c.b16 %v1065, %v1064
      %v1079 = vpack.c.b16 %v1067, %v1066
      %v1080 = vpack.c.b16 %v1069, %v1068
      %v1081 = vpack.c.b16 %v1071, %v1070
      %v1082 = vpack.c.b16 %v1073, %v1072
      %v1083 = vpack.c.b16 %v1075, %v1074
      %1092 = vmatprep.subr.bf16.mxu0 0
      %1093 = vmatpush1.bf16.msra.mxu0 %v1083
      %1094 = vmatprep.subr.bf16.mxu0 0
      %1095 = vmatpush1.bf16.msra.mxu0 %v1082
      %1096 = vmatprep.subr.bf16.mxu0 0
      %1097 = vmatpush1.bf16.msra.mxu0 %v1081
      %1098 = vmatprep.subr.bf16.mxu0 0
      %1099 = vmatpush1.bf16.msra.mxu0 %v1080
      %1100 = vmatprep.subr.bf16.mxu0 0
      %1101 = vmatpush1.bf16.msra.mxu0 %v1079
      %1102 = vmatprep.subr.bf16.mxu0 0
      %1103 = vmatpush1.bf16.msra.mxu0 %v1078
      %1104 = vmatprep.subr.bf16.mxu0 0
      %1105 = vmatpush1.bf16.msra.mxu0 %v1077
      %1106 = vmatprep.subr.bf16.mxu0 0
      %1107 = vmatpush1.bf16.msra.mxu0 %v1076
      %1108 = vmatprep.subr.bf16.mxu0 0
      %1109 = vmatpush2.bf16.msra.mxu0 0
      %1110 = vmatprep.subr.bf16.mxu0 0
      %1111 = vmatpush2.bf16.msra.mxu0 0
      %1112 = vmatprep.subr.bf16.mxu0 0
      %1113 = vmatpush2.bf16.msra.mxu0 0
      %1114 = vmatprep.subr.bf16.mxu0 0
      %1115 = vmatpush2.bf16.msra.mxu0 0
      %1116 = vmatprep.subr.bf16.mxu0 0
      %1117 = vmatpush2.bf16.msra.mxu0 0
      %1118 = vmatprep.subr.bf16.mxu0 0
      %1119 = vmatpush2.bf16.msra.mxu0 0
      %1120 = vmatprep.subr.bf16.mxu0 0
      %1121 = vmatpush2.bf16.msra.mxu0 0
      %1122 = vmatprep.subr.bf16.mxu0 0
      %1123 = vmatpush2.bf16.msra.mxu0 0
      %1124 = vmatprep.mubr.bf16.mxu0 0
      %1125 = vmatmul.mubr.bf16.gmra.mxu0 %v1003
      %v1126 = vpop.f32.mrf.mxu0
      %v1127 = vadd.f32 0.0, %v1126
      %v1128 = vpop.f32.mrf.mxu0
      %v1129 = vpop.f32.mrf.mxu0
      %v1130 = vadd.f32 0.0, %v1129
      %v1131 = vpop.f32.mrf.mxu0
      %1132 = vmatprep.mubr.bf16.mxu0 0
      %1133 = vmatmul.mubr.bf16.gmra.mxu0 %v1004
      %v1134 = vpop.f32.mrf.mxu0
      %v1135 = vadd.f32 0.0, %v1134
      %v1136 = vpop.f32.mrf.mxu0
      %v1137 = vpop.f32.mrf.mxu0
      %v1138 = vadd.f32 0.0, %v1137
      %v1139 = vpop.f32.mrf.mxu0
      %1140 = vmatprep.mubr.bf16.mxu0 0
      %1141 = vmatmul.mubr.bf16.gmra.mxu0 %v1005
      %v1142 = vpop.f32.mrf.mxu0
      %v1143 = vadd.f32 0.0, %v1142
      %v1144 = vpop.f32.mrf.mxu0
      %v1145 = vpop.f32.mrf.mxu0
      %v1146 = vadd.f32 0.0, %v1145
      %v1147 = vpop.f32.mrf.mxu0
      %1148 = vmatprep.mubr.bf16.mxu0 0
      %1149 = vmatmul.mubr.bf16.gmra.mxu0 %v1006
      %v1150 = vpop.f32.mrf.mxu0
      %v1151 = vadd.f32 0.0, %v1150
      %v1152 = vpop.f32.mrf.mxu0
      %v1153 = vpop.f32.mrf.mxu0
      %v1154 = vadd.f32 0.0, %v1153
      %v1155 = vpop.f32.mrf.mxu0
      %1156 = vmatprep.mubr.bf16.mxu0 0
      %1157 = vmatmul.mubr.bf16.gmra.mxu0 %v1007
      %v1158 = vpop.f32.mrf.mxu0
      %v1159 = vadd.f32 0.0, %v1158
      %v1160 = vpop.f32.mrf.mxu0
      %v1161 = vpop.f32.mrf.mxu0
      %v1162 = vadd.f32 0.0, %v1161
      %v1163 = vpop.f32.mrf.mxu0
      %1164 = vmatprep.mubr.bf16.mxu0 0
      %1165 = vmatmul.mubr.bf16.gmra.mxu0 %v1008
      %v1166 = vpop.f32.mrf.mxu0
      %v1167 = vadd.f32 0.0, %v1166
      %v1168 = vpop.f32.mrf.mxu0
      %v1169 = vpop.f32.mrf.mxu0
      %v1170 = vadd.f32 0.0, %v1169
      %v1171 = vpop.f32.mrf.mxu0
      %1172 = vmatprep.mubr.bf16.mxu0 0
      %1173 = vmatmul.mubr.bf16.gmra.mxu0 %v1009
      %v1174 = vpop.f32.mrf.mxu0
      %v1175 = vadd.f32 0.0, %v1174
      %v1176 = vpop.f32.mrf.mxu0
      %v1177 = vpop.f32.mrf.mxu0
      %v1178 = vadd.f32 0.0, %v1177
      %v1179 = vpop.f32.mrf.mxu0
      %1180 = vmatprep.mubr.bf16.mxu0 0
      %1181 = vmatmul.mubr.bf16.gmra.mxu0 %v1026
      %v1182 = vpop.f32.mrf.mxu0
      %v1183 = vadd.f32 0.0, %v1182
      %v1184 = vpop.f32.mrf.mxu0
      %v1185 = vpop.f32.mrf.mxu0
      %v1186 = vadd.f32 0.0, %v1185
      %v1187 = vpop.f32.mrf.mxu0
      %1188 = vdwg.mxu0
      %v1205 = vunpack.c.l.b16 %v1010
      %v1206 = vunpack.c.l.b16 %v1011
      %v1207 = vunpack.c.l.b16 %v1012
      %v1208 = vunpack.c.l.b16 %v1013
      %v1209 = vunpack.c.l.b16 %v1014
      %v1210 = vunpack.c.l.b16 %v1015
      %v1211 = vunpack.c.l.b16 %v1016
      %v1212 = vunpack.c.l.b16 %v1017
      %v1213 = vunpack.c.l.b16 %v1018
      %v1214 = vunpack.c.l.b16 %v1019
      %v1215 = vunpack.c.l.b16 %v1020
      %v1216 = vunpack.c.l.b16 %v1021
      %v1217 = vunpack.c.l.b16 %v1022
      %v1218 = vunpack.c.l.b16 %v1023
      %v1219 = vunpack.c.l.b16 %v1024
      %v1220 = vunpack.c.l.b16 %v1025
      %v1221 = vpack.c.b16 %v1206, %v1205
      %v1222 = vpack.c.b16 %v1208, %v1207
      %v1223 = vpack.c.b16 %v1210, %v1209
      %v1224 = vpack.c.b16 %v1212, %v1211
      %v1225 = vpack.c.b16 %v1214, %v1213
      %v1226 = vpack.c.b16 %v1216, %v1215
      %v1227 = vpack.c.b16 %v1218, %v1217
      %v1228 = vpack.c.b16 %v1220, %v1219
      %1237 = vmatprep.subr.bf16.mxu0 0
      %1238 = vmatpush1.bf16.msra.mxu0 %v1228
      %1239 = vmatprep.subr.bf16.mxu0 0
      %1240 = vmatpush1.bf16.msra.mxu0 %v1227
      %1241 = vmatprep.subr.bf16.mxu0 0
      %1242 = vmatpush1.bf16.msra.mxu0 %v1226
      %1243 = vmatprep.subr.bf16.mxu0 0
      %1244 = vmatpush1.bf16.msra.mxu0 %v1225
      %1245 = vmatprep.subr.bf16.mxu0 0
      %1246 = vmatpush1.bf16.msra.mxu0 %v1224
      %1247 = vmatprep.subr.bf16.mxu0 0
      %1248 = vmatpush1.bf16.msra.mxu0 %v1223
      %1249 = vmatprep.subr.bf16.mxu0 0
      %1250 = vmatpush1.bf16.msra.mxu0 %v1222
      %1251 = vmatprep.subr.bf16.mxu0 0
      %1252 = vmatpush1.bf16.msra.mxu0 %v1221
      %1253 = vmatprep.subr.bf16.mxu0 0
      %1254 = vmatpush2.bf16.msra.mxu0 0
      %1255 = vmatprep.subr.bf16.mxu0 0
      %1256 = vmatpush2.bf16.msra.mxu0 0
      %1257 = vmatprep.subr.bf16.mxu0 0
      %1258 = vmatpush2.bf16.msra.mxu0 0
      %1259 = vmatprep.subr.bf16.mxu0 0
      %1260 = vmatpush2.bf16.msra.mxu0 0
      %1261 = vmatprep.subr.bf16.mxu0 0
      %1262 = vmatpush2.bf16.msra.mxu0 0
      %1263 = vmatprep.subr.bf16.mxu0 0
      %1264 = vmatpush2.bf16.msra.mxu0 0
      %1265 = vmatprep.subr.bf16.mxu0 0
      %1266 = vmatpush2.bf16.msra.mxu0 0
      %1267 = vmatprep.subr.bf16.mxu0 0
      %1268 = vmatpush2.bf16.msra.mxu0 0
      %1269 = vmatprep.mubr.bf16.mxu0 0
      %1270 = vmatmul.mubr.bf16.gmra.mxu0 %v1002
      %v1271 = vpop.f32.mrf.mxu0
      %v1272 = vadd.f32 %v1127, %v1271
      %v1273 = vpop.f32.mrf.mxu0
      %v1274 = vpop.f32.mrf.mxu0
      %v1275 = vadd.f32 %v1130, %v1274
      %v1276 = vpop.f32.mrf.mxu0
      %1277 = vmatprep.mubr.bf16.mxu0 0
      %1278 = vmatmul.mubr.bf16.gmra.mxu0 %v1003
      %v1279 = vpop.f32.mrf.mxu0
      %v1280 = vadd.f32 %v1135, %v1279
      %v1281 = vpop.f32.mrf.mxu0
      %v1282 = vpop.f32.mrf.mxu0
      %v1283 = vadd.f32 %v1138, %v1282
      %v1284 = vpop.f32.mrf.mxu0
      %1285 = vmatprep.mubr.bf16.mxu0 0
      %1286 = vmatmul.mubr.bf16.gmra.mxu0 %v1004
      %v1287 = vpop.f32.mrf.mxu0
      %v1288 = vadd.f32 %v1143, %v1287
      %v1289 = vpop.f32.mrf.mxu0
      %v1290 = vpop.f32.mrf.mxu0
      %v1291 = vadd.f32 %v1146, %v1290
      %v1292 = vpop.f32.mrf.mxu0
      %1293 = vmatprep.mubr.bf16.mxu0 0
      %1294 = vmatmul.mubr.bf16.gmra.mxu0 %v1005
      %v1295 = vpop.f32.mrf.mxu0
      %v1296 = vadd.f32 %v1151, %v1295
      %v1297 = vpop.f32.mrf.mxu0
      %v1298 = vpop.f32.mrf.mxu0
      %v1299 = vadd.f32 %v1154, %v1298
      %v1300 = vpop.f32.mrf.mxu0
      %1301 = vmatprep.mubr.bf16.mxu0 0
      %1302 = vmatmul.mubr.bf16.gmra.mxu0 %v1006
      %v1303 = vpop.f32.mrf.mxu0
      %v1304 = vadd.f32 %v1159, %v1303
      %v1305 = vpop.f32.mrf.mxu0
      %v1306 = vpop.f32.mrf.mxu0
      %v1307 = vadd.f32 %v1162, %v1306
      %v1308 = vpop.f32.mrf.mxu0
      %1309 = vmatprep.mubr.bf16.mxu0 0
      %1310 = vmatmul.mubr.bf16.gmra.mxu0 %v1007
      %v1311 = vpop.f32.mrf.mxu0
      %v1312 = vadd.f32 %v1167, %v1311
      %v1313 = vpop.f32.mrf.mxu0
      %v1314 = vpop.f32.mrf.mxu0
      %v1315 = vadd.f32 %v1170, %v1314
      %v1316 = vpop.f32.mrf.mxu0
      %1317 = vmatprep.mubr.bf16.mxu0 0
      %1318 = vmatmul.mubr.bf16.gmra.mxu0 %v1008
      %v1319 = vpop.f32.mrf.mxu0
      %v1320 = vadd.f32 %v1175, %v1319
      %v1321 = vpop.f32.mrf.mxu0
      %v1322 = vpop.f32.mrf.mxu0
      %v1323 = vadd.f32 %v1178, %v1322
      %v1324 = vpop.f32.mrf.mxu0
      %1325 = vmatprep.mubr.bf16.mxu0 0
      %1326 = vmatmul.mubr.bf16.gmra.mxu0 %v1009
      %v1327 = vpop.f32.mrf.mxu0
      %v1328 = vadd.f32 %v1183, %v1327
      %v1329 = vpop.f32.mrf.mxu0
      %v1330 = vpop.f32.mrf.mxu0
      %v1331 = vadd.f32 %v1186, %v1330
      %v1332 = vpop.f32.mrf.mxu0
      %1333 = vdwg.mxu0
      %v1334 = vpack.c.bf16 %v1000, %v999
      %s1335 = scalar_lea.vmem %s5, 384
      %v1336 = vld [vmem:[%s1335] sm:$0xf]
      %v1337 = vld [vmem:[%s1335 + $0x4] sm:$0xf]
      %v1338 = vld [vmem:[%s1335 + $0x8] sm:$0xf]
      %v1339 = vld [vmem:[%s1335 + $0xc] sm:$0xf]
      %v1340 = vld [vmem:[%s1335 + $0x10] sm:$0xf]
      %v1341 = vld [vmem:[%s1335 + $0x14] sm:$0xf]
      %v1342 = vld [vmem:[%s1335 + $0x18] sm:$0xf]
      %v1343 = vld [vmem:[%s1335 + $0x1c] sm:$0xf]
      %v1344 = vld [vmem:[%s1335 + $0x20] sm:$0xf]
      %v1345 = vld [vmem:[%s1335 + $0x24] sm:$0xf]
      %v1346 = vld [vmem:[%s1335 + $0x28] sm:$0xf]
      %v1347 = vld [vmem:[%s1335 + $0x2c] sm:$0xf]
      %v1348 = vld [vmem:[%s1335 + $0x30] sm:$0xf]
      %v1349 = vld [vmem:[%s1335 + $0x34] sm:$0xf]
      %v1350 = vld [vmem:[%s1335 + $0x38] sm:$0xf]
      %v1351 = vld [vmem:[%s1335 + $0x3c] sm:$0xf]
      %v1368 = vunpack.c.l.b16 %v1336
      %v1369 = vunpack.c.l.b16 %v1337
      %v1370 = vunpack.c.l.b16 %v1338
      %v1371 = vunpack.c.l.b16 %v1339
      %v1372 = vunpack.c.l.b16 %v1340
      %v1373 = vunpack.c.l.b16 %v1341
      %v1374 = vunpack.c.l.b16 %v1342
      %v1375 = vunpack.c.l.b16 %v1343
      %v1376 = vunpack.c.l.b16 %v1344
      %v1377 = vunpack.c.l.b16 %v1345
      %v1378 = vunpack.c.l.b16 %v1346
      %v1379 = vunpack.c.l.b16 %v1347
      %v1380 = vunpack.c.l.b16 %v1348
      %v1381 = vunpack.c.l.b16 %v1349
      %v1382 = vunpack.c.l.b16 %v1350
      %v1383 = vunpack.c.l.b16 %v1351
      %v1384 = vpack.c.b16 %v1369, %v1368
      %v1385 = vpack.c.b16 %v1371, %v1370
      %v1386 = vpack.c.b16 %v1373, %v1372
      %v1387 = vpack.c.b16 %v1375, %v1374
      %v1388 = vpack.c.b16 %v1377, %v1376
      %v1389 = vpack.c.b16 %v1379, %v1378
      %v1390 = vpack.c.b16 %v1381, %v1380
      %v1391 = vpack.c.b16 %v1383, %v1382
      %1400 = vmatprep.subr.bf16.mxu0 0
      %1401 = vmatpush1.bf16.msra.mxu0 %v1391
      %1402 = vmatprep.subr.bf16.mxu0 0
      %1403 = vmatpush1.bf16.msra.mxu0 %v1390
      %1404 = vmatprep.subr.bf16.mxu0 0
      %1405 = vmatpush1.bf16.msra.mxu0 %v1389
      %1406 = vmatprep.subr.bf16.mxu0 0
      %1407 = vmatpush1.bf16.msra.mxu0 %v1388
      %1408 = vmatprep.subr.bf16.mxu0 0
      %1409 = vmatpush1.bf16.msra.mxu0 %v1387
      %1410 = vmatprep.subr.bf16.mxu0 0
      %1411 = vmatpush1.bf16.msra.mxu0 %v1386
      %1412 = vmatprep.subr.bf16.mxu0 0
      %1413 = vmatpush1.bf16.msra.mxu0 %v1385
      %1414 = vmatprep.subr.bf16.mxu0 0
      %1415 = vmatpush1.bf16.msra.mxu0 %v1384
      %1416 = vmatprep.subr.bf16.mxu0 0
      %1417 = vmatpush2.bf16.msra.mxu0 0
      %1418 = vmatprep.subr.bf16.mxu0 0
      %1419 = vmatpush2.bf16.msra.mxu0 0
      %1420 = vmatprep.subr.bf16.mxu0 0
      %1421 = vmatpush2.bf16.msra.mxu0 0
      %1422 = vmatprep.subr.bf16.mxu0 0
      %1423 = vmatpush2.bf16.msra.mxu0 0
      %1424 = vmatprep.subr.bf16.mxu0 0
      %1425 = vmatpush2.bf16.msra.mxu0 0
      %1426 = vmatprep.subr.bf16.mxu0 0
      %1427 = vmatpush2.bf16.msra.mxu0 0
      %1428 = vmatprep.subr.bf16.mxu0 0
      %1429 = vmatpush2.bf16.msra.mxu0 0
      %1430 = vmatprep.subr.bf16.mxu0 0
      %1431 = vmatpush2.bf16.msra.mxu0 0
      %1432 = vmatprep.mubr.bf16.mxu0 0
      %1433 = vmatmul.mubr.bf16.gmra.mxu0 %v1004
      %v1434 = vpop.f32.mrf.mxu0
      %v1435 = vadd.f32 0.0, %v1434
      %v1436 = vpop.f32.mrf.mxu0
      %v1437 = vpop.f32.mrf.mxu0
      %v1438 = vadd.f32 0.0, %v1437
      %v1439 = vpop.f32.mrf.mxu0
      %1440 = vmatprep.mubr.bf16.mxu0 0
      %1441 = vmatmul.mubr.bf16.gmra.mxu0 %v1005
      %v1442 = vpop.f32.mrf.mxu0
      %v1443 = vadd.f32 0.0, %v1442
      %v1444 = vpop.f32.mrf.mxu0
      %v1445 = vpop.f32.mrf.mxu0
      %v1446 = vadd.f32 0.0, %v1445
      %v1447 = vpop.f32.mrf.mxu0
      %1448 = vmatprep.mubr.bf16.mxu0 0
      %1449 = vmatmul.mubr.bf16.gmra.mxu0 %v1006
      %v1450 = vpop.f32.mrf.mxu0
      %v1451 = vadd.f32 0.0, %v1450
      %v1452 = vpop.f32.mrf.mxu0
      %v1453 = vpop.f32.mrf.mxu0
      %v1454 = vadd.f32 0.0, %v1453
      %v1455 = vpop.f32.mrf.mxu0
      %1456 = vmatprep.mubr.bf16.mxu0 0
      %1457 = vmatmul.mubr.bf16.gmra.mxu0 %v1007
      %v1458 = vpop.f32.mrf.mxu0
      %v1459 = vadd.f32 0.0, %v1458
      %v1460 = vpop.f32.mrf.mxu0
      %v1461 = vpop.f32.mrf.mxu0
      %v1462 = vadd.f32 0.0, %v1461
      %v1463 = vpop.f32.mrf.mxu0
      %1464 = vmatprep.mubr.bf16.mxu0 0
      %1465 = vmatmul.mubr.bf16.gmra.mxu0 %v1008
      %v1466 = vpop.f32.mrf.mxu0
      %v1467 = vadd.f32 0.0, %v1466
      %v1468 = vpop.f32.mrf.mxu0
      %v1469 = vpop.f32.mrf.mxu0
      %v1470 = vadd.f32 0.0, %v1469
      %v1471 = vpop.f32.mrf.mxu0
      %1472 = vmatprep.mubr.bf16.mxu0 0
      %1473 = vmatmul.mubr.bf16.gmra.mxu0 %v1009
      %v1474 = vpop.f32.mrf.mxu0
      %v1475 = vadd.f32 0.0, %v1474
      %v1476 = vpop.f32.mrf.mxu0
      %v1477 = vpop.f32.mrf.mxu0
      %v1478 = vadd.f32 0.0, %v1477
      %v1479 = vpop.f32.mrf.mxu0
      %1480 = vmatprep.mubr.bf16.mxu0 0
      %1481 = vmatmul.mubr.bf16.gmra.mxu0 %v1026
      %v1482 = vpop.f32.mrf.mxu0
      %v1483 = vadd.f32 0.0, %v1482
      %v1484 = vpop.f32.mrf.mxu0
      %v1485 = vpop.f32.mrf.mxu0
      %v1486 = vadd.f32 0.0, %v1485
      %v1487 = vpop.f32.mrf.mxu0
      %1488 = vmatprep.mubr.bf16.mxu0 0
      %1489 = vmatmul.mubr.bf16.gmra.mxu0 %v1334
      %v1490 = vpop.f32.mrf.mxu0
      %v1491 = vadd.f32 0.0, %v1490
      %v1492 = vpop.f32.mrf.mxu0
      %v1493 = vpop.f32.mrf.mxu0
      %v1494 = vadd.f32 0.0, %v1493
      %v1495 = vpop.f32.mrf.mxu0
      %1496 = vdwg.mxu0
      %v1497 = vadd.f32 %v1272, %v1435
      %v1498 = vadd.f32 %v1275, %v1438
      %v1499 = vadd.f32 %v1280, %v1443
      %v1500 = vadd.f32 %v1283, %v1446
      %v1501 = vadd.f32 %v1288, %v1451
      %v1502 = vadd.f32 %v1291, %v1454
      %v1503 = vadd.f32 %v1296, %v1459
      %v1504 = vadd.f32 %v1299, %v1462
      %v1505 = vadd.f32 %v1304, %v1467
      %v1506 = vadd.f32 %v1307, %v1470
      %v1507 = vadd.f32 %v1312, %v1475
      %v1508 = vadd.f32 %v1315, %v1478
      %v1509 = vadd.f32 %v1320, %v1483
      %v1510 = vadd.f32 %v1323, %v1486
      %v1511 = vadd.f32 %v1328, %v1491
      %v1512 = vadd.f32 %v1331, %v1494
      %vm1537 = vcmask 1046528
      %v1538 = vrot.slane %v972, 1
      %v1539 = vrot.slane %v973, 1
      %v1540 = vsel %vm1537, %v1538, %v1539
      %v1541 = vrot.slane %v974, 1
      %v1542 = vsel %vm1537, %v1539, %v1541
      %v1543 = vrot.slane %v975, 1
      %v1544 = vrot.slane %v976, 1
      %v1545 = vsel %vm1537, %v1543, %v1544
      %v1546 = vrot.slane %v977, 1
      %v1547 = vsel %vm1537, %v1544, %v1546
      %v1548 = vrot.slane %v978, 1
      %v1549 = vrot.slane %v979, 1
      %v1550 = vsel %vm1537, %v1548, %v1549
      %v1551 = vrot.slane %v980, 1
      %v1552 = vsel %vm1537, %v1549, %v1551
      %v1553 = vrot.slane %v981, 1
      %v1554 = vrot.slane %v982, 1
      %v1555 = vsel %vm1537, %v1553, %v1554
      %v1556 = vrot.slane %v983, 1
      %v1557 = vsel %vm1537, %v1554, %v1556
      %v1558 = vrot.slane %v984, 1
      %v1559 = vrot.slane %v985, 1
      %v1560 = vsel %vm1537, %v1558, %v1559
      %v1561 = vrot.slane %v986, 1
      %v1562 = vsel %vm1537, %v1559, %v1561
      %v1563 = vrot.slane %v987, 1
      %v1564 = vrot.slane %v988, 1
      %v1565 = vsel %vm1537, %v1563, %v1564
      %v1566 = vrot.slane %v989, 1
      %v1567 = vsel %vm1537, %v1564, %v1566
      %v1568 = vrot.slane %v990, 1
      %v1569 = vrot.slane %v991, 1
      %v1570 = vsel %vm1537, %v1568, %v1569
      %v1571 = vrot.slane %v992, 1
      %v1572 = vsel %vm1537, %v1569, %v1571
      %v1573 = vrot.slane %v993, 1
      %v1574 = vrot.slane %v994, 1
      %v1575 = vsel %vm1537, %v1573, %v1574
      %v1576 = vrot.slane %v995, 1
      %v1577 = vsel %vm1537, %v1574, %v1576
      %v1594 = vpack.c.bf16 %v1542, %v1540
      %v1595 = vpack.c.bf16 %v1547, %v1545
      %v1596 = vpack.c.bf16 %v1552, %v1550
      %v1597 = vpack.c.bf16 %v1557, %v1555
      %v1598 = vpack.c.bf16 %v1562, %v1560
      %v1599 = vpack.c.bf16 %v1567, %v1565
      %v1600 = vpack.c.bf16 %v1572, %v1570
      %v1601 = vpack.c.bf16 %v1577, %v1575
      %s1602 = scalar_lea.vmem %s5, 64
      %v1603 = vld [vmem:[%s1602] sm:$0xf]
      %v1604 = vld [vmem:[%s1602 + $0x4] sm:$0xf]
      %v1605 = vld [vmem:[%s1602 + $0x8] sm:$0xf]
      %v1606 = vld [vmem:[%s1602 + $0xc] sm:$0xf]
      %v1607 = vld [vmem:[%s1602 + $0x10] sm:$0xf]
      %v1608 = vld [vmem:[%s1602 + $0x14] sm:$0xf]
      %v1609 = vld [vmem:[%s1602 + $0x18] sm:$0xf]
      %v1610 = vld [vmem:[%s1602 + $0x1c] sm:$0xf]
      %v1611 = vld [vmem:[%s1602 + $0x20] sm:$0xf]
      %v1612 = vld [vmem:[%s1602 + $0x24] sm:$0xf]
      %v1613 = vld [vmem:[%s1602 + $0x28] sm:$0xf]
      %v1614 = vld [vmem:[%s1602 + $0x2c] sm:$0xf]
      %v1615 = vld [vmem:[%s1602 + $0x30] sm:$0xf]
      %v1616 = vld [vmem:[%s1602 + $0x34] sm:$0xf]
      %v1617 = vld [vmem:[%s1602 + $0x38] sm:$0xf]
      %v1618 = vld [vmem:[%s1602 + $0x3c] sm:$0xf]
      %v1635 = vunpack.c.l.b16 %v1603
      %v1636 = vunpack.c.l.b16 %v1604
      %v1637 = vunpack.c.l.b16 %v1605
      %v1638 = vunpack.c.l.b16 %v1606
      %v1639 = vunpack.c.l.b16 %v1607
      %v1640 = vunpack.c.l.b16 %v1608
      %v1641 = vunpack.c.l.b16 %v1609
      %v1642 = vunpack.c.l.b16 %v1610
      %v1643 = vunpack.c.l.b16 %v1611
      %v1644 = vunpack.c.l.b16 %v1612
      %v1645 = vunpack.c.l.b16 %v1613
      %v1646 = vunpack.c.l.b16 %v1614
      %v1647 = vunpack.c.l.b16 %v1615
      %v1648 = vunpack.c.l.b16 %v1616
      %v1649 = vunpack.c.l.b16 %v1617
      %v1650 = vunpack.c.l.b16 %v1618
      %v1651 = vpack.c.b16 %v1636, %v1635
      %v1652 = vpack.c.b16 %v1638, %v1637
      %v1653 = vpack.c.b16 %v1640, %v1639
      %v1654 = vpack.c.b16 %v1642, %v1641
      %v1655 = vpack.c.b16 %v1644, %v1643
      %v1656 = vpack.c.b16 %v1646, %v1645
      %v1657 = vpack.c.b16 %v1648, %v1647
      %v1658 = vpack.c.b16 %v1650, %v1649
      %1667 = vmatprep.subr.bf16.mxu0 0
      %1668 = vmatpush1.bf16.msra.mxu0 %v1658
      %1669 = vmatprep.subr.bf16.mxu0 0
      %1670 = vmatpush1.bf16.msra.mxu0 %v1657
      %1671 = vmatprep.subr.bf16.mxu0 0
      %1672 = vmatpush1.bf16.msra.mxu0 %v1656
      %1673 = vmatprep.subr.bf16.mxu0 0
      %1674 = vmatpush1.bf16.msra.mxu0 %v1655
      %1675 = vmatprep.subr.bf16.mxu0 0
      %1676 = vmatpush1.bf16.msra.mxu0 %v1654
      %1677 = vmatprep.subr.bf16.mxu0 0
      %1678 = vmatpush1.bf16.msra.mxu0 %v1653
      %1679 = vmatprep.subr.bf16.mxu0 0
      %1680 = vmatpush1.bf16.msra.mxu0 %v1652
      %1681 = vmatprep.subr.bf16.mxu0 0
      %1682 = vmatpush1.bf16.msra.mxu0 %v1651
      %1683 = vmatprep.subr.bf16.mxu0 0
      %1684 = vmatpush2.bf16.msra.mxu0 0
      %1685 = vmatprep.subr.bf16.mxu0 0
      %1686 = vmatpush2.bf16.msra.mxu0 0
      %1687 = vmatprep.subr.bf16.mxu0 0
      %1688 = vmatpush2.bf16.msra.mxu0 0
      %1689 = vmatprep.subr.bf16.mxu0 0
      %1690 = vmatpush2.bf16.msra.mxu0 0
      %1691 = vmatprep.subr.bf16.mxu0 0
      %1692 = vmatpush2.bf16.msra.mxu0 0
      %1693 = vmatprep.subr.bf16.mxu0 0
      %1694 = vmatpush2.bf16.msra.mxu0 0
      %1695 = vmatprep.subr.bf16.mxu0 0
      %1696 = vmatpush2.bf16.msra.mxu0 0
      %1697 = vmatprep.subr.bf16.mxu0 0
      %1698 = vmatpush2.bf16.msra.mxu0 0
      %1699 = vmatprep.mubr.bf16.mxu0 0
      %1700 = vmatmul.mubr.bf16.gmra.mxu0 %v1594
      %v1701 = vpop.f32.mrf.mxu0
      %v1702 = vadd.f32 0.0, %v1701
      %v1703 = vpop.f32.mrf.mxu0
      %v1704 = vpop.f32.mrf.mxu0
      %v1705 = vadd.f32 0.0, %v1704
      %v1706 = vpop.f32.mrf.mxu0
      %1707 = vmatprep.mubr.bf16.mxu0 0
      %1708 = vmatmul.mubr.bf16.gmra.mxu0 %v1595
      %v1709 = vpop.f32.mrf.mxu0
      %v1710 = vadd.f32 0.0, %v1709
      %v1711 = vpop.f32.mrf.mxu0
      %v1712 = vpop.f32.mrf.mxu0
      %v1713 = vadd.f32 0.0, %v1712
      %v1714 = vpop.f32.mrf.mxu0
      %1715 = vmatprep.mubr.bf16.mxu0 0
      %1716 = vmatmul.mubr.bf16.gmra.mxu0 %v1596
      %v1717 = vpop.f32.mrf.mxu0
      %v1718 = vadd.f32 0.0, %v1717
      %v1719 = vpop.f32.mrf.mxu0
      %v1720 = vpop.f32.mrf.mxu0
      %v1721 = vadd.f32 0.0, %v1720
      %v1722 = vpop.f32.mrf.mxu0
      %1723 = vmatprep.mubr.bf16.mxu0 0
      %1724 = vmatmul.mubr.bf16.gmra.mxu0 %v1597
      %v1725 = vpop.f32.mrf.mxu0
      %v1726 = vadd.f32 0.0, %v1725
      %v1727 = vpop.f32.mrf.mxu0
      %v1728 = vpop.f32.mrf.mxu0
      %v1729 = vadd.f32 0.0, %v1728
      %v1730 = vpop.f32.mrf.mxu0
      %1731 = vmatprep.mubr.bf16.mxu0 0
      %1732 = vmatmul.mubr.bf16.gmra.mxu0 %v1598
      %v1733 = vpop.f32.mrf.mxu0
      %v1734 = vadd.f32 0.0, %v1733
      %v1735 = vpop.f32.mrf.mxu0
      %v1736 = vpop.f32.mrf.mxu0
      %v1737 = vadd.f32 0.0, %v1736
      %v1738 = vpop.f32.mrf.mxu0
      %1739 = vmatprep.mubr.bf16.mxu0 0
      %1740 = vmatmul.mubr.bf16.gmra.mxu0 %v1599
      %v1741 = vpop.f32.mrf.mxu0
      %v1742 = vadd.f32 0.0, %v1741
      %v1743 = vpop.f32.mrf.mxu0
      %v1744 = vpop.f32.mrf.mxu0
      %v1745 = vadd.f32 0.0, %v1744
      %v1746 = vpop.f32.mrf.mxu0
      %1747 = vmatprep.mubr.bf16.mxu0 0
      %1748 = vmatmul.mubr.bf16.gmra.mxu0 %v1600
      %v1749 = vpop.f32.mrf.mxu0
      %v1750 = vadd.f32 0.0, %v1749
      %v1751 = vpop.f32.mrf.mxu0
      %v1752 = vpop.f32.mrf.mxu0
      %v1753 = vadd.f32 0.0, %v1752
      %v1754 = vpop.f32.mrf.mxu0
      %1755 = vmatprep.mubr.bf16.mxu0 0
      %1756 = vmatmul.mubr.bf16.gmra.mxu0 %v1601
      %v1757 = vpop.f32.mrf.mxu0
      %v1758 = vadd.f32 0.0, %v1757
      %v1759 = vpop.f32.mrf.mxu0
      %v1760 = vpop.f32.mrf.mxu0
      %v1761 = vadd.f32 0.0, %v1760
      %v1762 = vpop.f32.mrf.mxu0
      %1763 = vdwg.mxu0
      %v1764 = vadd.f32 %v1497, %v1702
      %v1765 = vadd.f32 %v1498, %v1705
      %v1766 = vadd.f32 %v1499, %v1710
      %v1767 = vadd.f32 %v1500, %v1713
      %v1768 = vadd.f32 %v1501, %v1718
      %v1769 = vadd.f32 %v1502, %v1721
      %v1770 = vadd.f32 %v1503, %v1726
      %v1771 = vadd.f32 %v1504, %v1729
      %v1772 = vadd.f32 %v1505, %v1734
      %v1773 = vadd.f32 %v1506, %v1737
      %v1774 = vadd.f32 %v1507, %v1742
      %v1775 = vadd.f32 %v1508, %v1745
      %v1776 = vadd.f32 %v1509, %v1750
      %v1777 = vadd.f32 %v1510, %v1753
      %v1778 = vadd.f32 %v1511, %v1758
      %v1779 = vadd.f32 %v1512, %v1761
      %v1783 = vrot.slane %v996, 1
      %v1784 = vrot.slane %v997, 1
      %v1785 = vsel %vm1537, %v1783, %v1784
      %v1786 = vrot.slane %v998, 1
      %v1787 = vsel %vm1537, %v1784, %v1786
      %v1790 = vpack.c.bf16 %v1787, %v1785
      %s1791 = scalar_lea.vmem %s5, 256
      %v1792 = vld [vmem:[%s1791] sm:$0xf]
      %v1793 = vld [vmem:[%s1791 + $0x4] sm:$0xf]
      %v1794 = vld [vmem:[%s1791 + $0x8] sm:$0xf]
      %v1795 = vld [vmem:[%s1791 + $0xc] sm:$0xf]
      %v1796 = vld [vmem:[%s1791 + $0x10] sm:$0xf]
      %v1797 = vld [vmem:[%s1791 + $0x14] sm:$0xf]
      %v1798 = vld [vmem:[%s1791 + $0x18] sm:$0xf]
      %v1799 = vld [vmem:[%s1791 + $0x1c] sm:$0xf]
      %v1800 = vld [vmem:[%s1791 + $0x20] sm:$0xf]
      %v1801 = vld [vmem:[%s1791 + $0x24] sm:$0xf]
      %v1802 = vld [vmem:[%s1791 + $0x28] sm:$0xf]
      %v1803 = vld [vmem:[%s1791 + $0x2c] sm:$0xf]
      %v1804 = vld [vmem:[%s1791 + $0x30] sm:$0xf]
      %v1805 = vld [vmem:[%s1791 + $0x34] sm:$0xf]
      %v1806 = vld [vmem:[%s1791 + $0x38] sm:$0xf]
      %v1807 = vld [vmem:[%s1791 + $0x3c] sm:$0xf]
      %v1824 = vunpack.c.l.b16 %v1792
      %v1825 = vunpack.c.l.b16 %v1793
      %v1826 = vunpack.c.l.b16 %v1794
      %v1827 = vunpack.c.l.b16 %v1795
      %v1828 = vunpack.c.l.b16 %v1796
      %v1829 = vunpack.c.l.b16 %v1797
      %v1830 = vunpack.c.l.b16 %v1798
      %v1831 = vunpack.c.l.b16 %v1799
      %v1832 = vunpack.c.l.b16 %v1800
      %v1833 = vunpack.c.l.b16 %v1801
      %v1834 = vunpack.c.l.b16 %v1802
      %v1835 = vunpack.c.l.b16 %v1803
      %v1836 = vunpack.c.l.b16 %v1804
      %v1837 = vunpack.c.l.b16 %v1805
      %v1838 = vunpack.c.l.b16 %v1806
      %v1839 = vunpack.c.l.b16 %v1807
      %v1840 = vpack.c.b16 %v1825, %v1824
      %v1841 = vpack.c.b16 %v1827, %v1826
      %v1842 = vpack.c.b16 %v1829, %v1828
      %v1843 = vpack.c.b16 %v1831, %v1830
      %v1844 = vpack.c.b16 %v1833, %v1832
      %v1845 = vpack.c.b16 %v1835, %v1834
      %v1846 = vpack.c.b16 %v1837, %v1836
      %v1847 = vpack.c.b16 %v1839, %v1838
      %1856 = vmatprep.subr.bf16.mxu0 0
      %1857 = vmatpush1.bf16.msra.mxu0 %v1847
      %1858 = vmatprep.subr.bf16.mxu0 0
      %1859 = vmatpush1.bf16.msra.mxu0 %v1846
      %1860 = vmatprep.subr.bf16.mxu0 0
      %1861 = vmatpush1.bf16.msra.mxu0 %v1845
      %1862 = vmatprep.subr.bf16.mxu0 0
      %1863 = vmatpush1.bf16.msra.mxu0 %v1844
      %1864 = vmatprep.subr.bf16.mxu0 0
      %1865 = vmatpush1.bf16.msra.mxu0 %v1843
      %1866 = vmatprep.subr.bf16.mxu0 0
      %1867 = vmatpush1.bf16.msra.mxu0 %v1842
      %1868 = vmatprep.subr.bf16.mxu0 0
      %1869 = vmatpush1.bf16.msra.mxu0 %v1841
      %1870 = vmatprep.subr.bf16.mxu0 0
      %1871 = vmatpush1.bf16.msra.mxu0 %v1840
      %1872 = vmatprep.subr.bf16.mxu0 0
      %1873 = vmatpush2.bf16.msra.mxu0 0
      %1874 = vmatprep.subr.bf16.mxu0 0
      %1875 = vmatpush2.bf16.msra.mxu0 0
      %1876 = vmatprep.subr.bf16.mxu0 0
      %1877 = vmatpush2.bf16.msra.mxu0 0
      %1878 = vmatprep.subr.bf16.mxu0 0
      %1879 = vmatpush2.bf16.msra.mxu0 0
      %1880 = vmatprep.subr.bf16.mxu0 0
      %1881 = vmatpush2.bf16.msra.mxu0 0
      %1882 = vmatprep.subr.bf16.mxu0 0
      %1883 = vmatpush2.bf16.msra.mxu0 0
      %1884 = vmatprep.subr.bf16.mxu0 0
      %1885 = vmatpush2.bf16.msra.mxu0 0
      %1886 = vmatprep.subr.bf16.mxu0 0
      %1887 = vmatpush2.bf16.msra.mxu0 0
      %1888 = vmatprep.mubr.bf16.mxu0 0
      %1889 = vmatmul.mubr.bf16.gmra.mxu0 %v1595
      %v1890 = vpop.f32.mrf.mxu0
      %v1891 = vadd.f32 0.0, %v1890
      %v1892 = vpop.f32.mrf.mxu0
      %v1893 = vpop.f32.mrf.mxu0
      %v1894 = vadd.f32 0.0, %v1893
      %v1895 = vpop.f32.mrf.mxu0
      %1896 = vmatprep.mubr.bf16.mxu0 0
      %1897 = vmatmul.mubr.bf16.gmra.mxu0 %v1596
      %v1898 = vpop.f32.mrf.mxu0
      %v1899 = vadd.f32 0.0, %v1898
      %v1900 = vpop.f32.mrf.mxu0
      %v1901 = vpop.f32.mrf.mxu0
      %v1902 = vadd.f32 0.0, %v1901
      %v1903 = vpop.f32.mrf.mxu0
      %1904 = vmatprep.mubr.bf16.mxu0 0
      %1905 = vmatmul.mubr.bf16.gmra.mxu0 %v1597
      %v1906 = vpop.f32.mrf.mxu0
      %v1907 = vadd.f32 0.0, %v1906
      %v1908 = vpop.f32.mrf.mxu0
      %v1909 = vpop.f32.mrf.mxu0
      %v1910 = vadd.f32 0.0, %v1909
      %v1911 = vpop.f32.mrf.mxu0
      %1912 = vmatprep.mubr.bf16.mxu0 0
      %1913 = vmatmul.mubr.bf16.gmra.mxu0 %v1598
      %v1914 = vpop.f32.mrf.mxu0
      %v1915 = vadd.f32 0.0, %v1914
      %v1916 = vpop.f32.mrf.mxu0
      %v1917 = vpop.f32.mrf.mxu0
      %v1918 = vadd.f32 0.0, %v1917
      %v1919 = vpop.f32.mrf.mxu0
      %1920 = vmatprep.mubr.bf16.mxu0 0
      %1921 = vmatmul.mubr.bf16.gmra.mxu0 %v1599
      %v1922 = vpop.f32.mrf.mxu0
      %v1923 = vadd.f32 0.0, %v1922
      %v1924 = vpop.f32.mrf.mxu0
      %v1925 = vpop.f32.mrf.mxu0
      %v1926 = vadd.f32 0.0, %v1925
      %v1927 = vpop.f32.mrf.mxu0
      %1928 = vmatprep.mubr.bf16.mxu0 0
      %1929 = vmatmul.mubr.bf16.gmra.mxu0 %v1600
      %v1930 = vpop.f32.mrf.mxu0
      %v1931 = vadd.f32 0.0, %v1930
      %v1932 = vpop.f32.mrf.mxu0
      %v1933 = vpop.f32.mrf.mxu0
      %v1934 = vadd.f32 0.0, %v1933
      %v1935 = vpop.f32.mrf.mxu0
      %1936 = vmatprep.mubr.bf16.mxu0 0
      %1937 = vmatmul.mubr.bf16.gmra.mxu0 %v1601
      %v1938 = vpop.f32.mrf.mxu0
      %v1939 = vadd.f32 0.0, %v1938
      %v1940 = vpop.f32.mrf.mxu0
      %v1941 = vpop.f32.mrf.mxu0
      %v1942 = vadd.f32 0.0, %v1941
      %v1943 = vpop.f32.mrf.mxu0
      %1944 = vmatprep.mubr.bf16.mxu0 0
      %1945 = vmatmul.mubr.bf16.gmra.mxu0 %v1790
      %v1946 = vpop.f32.mrf.mxu0
      %v1947 = vadd.f32 0.0, %v1946
      %v1948 = vpop.f32.mrf.mxu0
      %v1949 = vpop.f32.mrf.mxu0
      %v1950 = vadd.f32 0.0, %v1949
      %v1951 = vpop.f32.mrf.mxu0
      %1952 = vdwg.mxu0
      %v1953 = vadd.f32 %v1764, %v1891
      %v1954 = vadd.f32 %v1765, %v1894
      %v1955 = vadd.f32 %v1766, %v1899
      %v1956 = vadd.f32 %v1767, %v1902
      %v1957 = vadd.f32 %v1768, %v1907
      %v1958 = vadd.f32 %v1769, %v1910
      %v1959 = vadd.f32 %v1770, %v1915
      %v1960 = vadd.f32 %v1771, %v1918
      %v1961 = vadd.f32 %v1772, %v1923
      %v1962 = vadd.f32 %v1773, %v1926
      %v1963 = vadd.f32 %v1774, %v1931
      %v1964 = vadd.f32 %v1775, %v1934
      %v1965 = vadd.f32 %v1776, %v1939
      %v1966 = vadd.f32 %v1777, %v1942
      %v1967 = vadd.f32 %v1778, %v1947
      %v1968 = vadd.f32 %v1779, %v1950
      %v1972 = vrot.slane %v999, 1
      %v1973 = vrot.slane %v1000, 1
      %v1974 = vsel %vm1537, %v1972, %v1973
      %v1975 = vrot.slane %v1001, 1
      %v1976 = vsel %vm1537, %v1973, %v1975
      %v1979 = vpack.c.bf16 %v1976, %v1974
      %s1980 = scalar_lea.vmem %s5, 448
      %v1981 = vld [vmem:[%s1980] sm:$0xf]
      %v1982 = vld [vmem:[%s1980 + $0x4] sm:$0xf]
      %v1983 = vld [vmem:[%s1980 + $0x8] sm:$0xf]
      %v1984 = vld [vmem:[%s1980 + $0xc] sm:$0xf]
      %v1985 = vld [vmem:[%s1980 + $0x10] sm:$0xf]
      %v1986 = vld [vmem:[%s1980 + $0x14] sm:$0xf]
      %v1987 = vld [vmem:[%s1980 + $0x18] sm:$0xf]
      %v1988 = vld [vmem:[%s1980 + $0x1c] sm:$0xf]
      %v1989 = vld [vmem:[%s1980 + $0x20] sm:$0xf]
      %v1990 = vld [vmem:[%s1980 + $0x24] sm:$0xf]
      %v1991 = vld [vmem:[%s1980 + $0x28] sm:$0xf]
      %v1992 = vld [vmem:[%s1980 + $0x2c] sm:$0xf]
      %v1993 = vld [vmem:[%s1980 + $0x30] sm:$0xf]
      %v1994 = vld [vmem:[%s1980 + $0x34] sm:$0xf]
      %v1995 = vld [vmem:[%s1980 + $0x38] sm:$0xf]
      %v1996 = vld [vmem:[%s1980 + $0x3c] sm:$0xf]
      %v2013 = vunpack.c.l.b16 %v1981
      %v2014 = vunpack.c.l.b16 %v1982
      %v2015 = vunpack.c.l.b16 %v1983
      %v2016 = vunpack.c.l.b16 %v1984
      %v2017 = vunpack.c.l.b16 %v1985
      %v2018 = vunpack.c.l.b16 %v1986
      %v2019 = vunpack.c.l.b16 %v1987
      %v2020 = vunpack.c.l.b16 %v1988
      %v2021 = vunpack.c.l.b16 %v1989
      %v2022 = vunpack.c.l.b16 %v1990
      %v2023 = vunpack.c.l.b16 %v1991
      %v2024 = vunpack.c.l.b16 %v1992
      %v2025 = vunpack.c.l.b16 %v1993
      %v2026 = vunpack.c.l.b16 %v1994
      %v2027 = vunpack.c.l.b16 %v1995
      %v2028 = vunpack.c.l.b16 %v1996
      %v2029 = vpack.c.b16 %v2014, %v2013
      %v2030 = vpack.c.b16 %v2016, %v2015
      %v2031 = vpack.c.b16 %v2018, %v2017
      %v2032 = vpack.c.b16 %v2020, %v2019
      %v2033 = vpack.c.b16 %v2022, %v2021
      %v2034 = vpack.c.b16 %v2024, %v2023
      %v2035 = vpack.c.b16 %v2026, %v2025
      %v2036 = vpack.c.b16 %v2028, %v2027
      %2045 = vmatprep.subr.bf16.mxu0 0
      %2046 = vmatpush1.bf16.msra.mxu0 %v2036
      %2047 = vmatprep.subr.bf16.mxu0 0
      %2048 = vmatpush1.bf16.msra.mxu0 %v2035
      %2049 = vmatprep.subr.bf16.mxu0 0
      %2050 = vmatpush1.bf16.msra.mxu0 %v2034
      %2051 = vmatprep.subr.bf16.mxu0 0
      %2052 = vmatpush1.bf16.msra.mxu0 %v2033
      %2053 = vmatprep.subr.bf16.mxu0 0
      %2054 = vmatpush1.bf16.msra.mxu0 %v2032
      %2055 = vmatprep.subr.bf16.mxu0 0
      %2056 = vmatpush1.bf16.msra.mxu0 %v2031
      %2057 = vmatprep.subr.bf16.mxu0 0
      %2058 = vmatpush1.bf16.msra.mxu0 %v2030
      %2059 = vmatprep.subr.bf16.mxu0 0
      %2060 = vmatpush1.bf16.msra.mxu0 %v2029
      %2061 = vmatprep.subr.bf16.mxu0 0
      %2062 = vmatpush2.bf16.msra.mxu0 0
      %2063 = vmatprep.subr.bf16.mxu0 0
      %2064 = vmatpush2.bf16.msra.mxu0 0
      %2065 = vmatprep.subr.bf16.mxu0 0
      %2066 = vmatpush2.bf16.msra.mxu0 0
      %2067 = vmatprep.subr.bf16.mxu0 0
      %2068 = vmatpush2.bf16.msra.mxu0 0
      %2069 = vmatprep.subr.bf16.mxu0 0
      %2070 = vmatpush2.bf16.msra.mxu0 0
      %2071 = vmatprep.subr.bf16.mxu0 0
      %2072 = vmatpush2.bf16.msra.mxu0 0
      %2073 = vmatprep.subr.bf16.mxu0 0
      %2074 = vmatpush2.bf16.msra.mxu0 0
      %2075 = vmatprep.subr.bf16.mxu0 0
      %2076 = vmatpush2.bf16.msra.mxu0 0
      %2077 = vmatprep.mubr.bf16.mxu0 0
      %2078 = vmatmul.mubr.bf16.gmra.mxu0 %v1596
      %v2079 = vpop.f32.mrf.mxu0
      %v2080 = vadd.f32 0.0, %v2079
      %v2081 = vpop.f32.mrf.mxu0
      %v2082 = vpop.f32.mrf.mxu0
      %v2083 = vadd.f32 0.0, %v2082
      %v2084 = vpop.f32.mrf.mxu0
      %2085 = vmatprep.mubr.bf16.mxu0 0
      %2086 = vmatmul.mubr.bf16.gmra.mxu0 %v1597
      %v2087 = vpop.f32.mrf.mxu0
      %v2088 = vadd.f32 0.0, %v2087
      %v2089 = vpop.f32.mrf.mxu0
      %v2090 = vpop.f32.mrf.mxu0
      %v2091 = vadd.f32 0.0, %v2090
      %v2092 = vpop.f32.mrf.mxu0
      %2093 = vmatprep.mubr.bf16.mxu0 0
      %2094 = vmatmul.mubr.bf16.gmra.mxu0 %v1598
      %v2095 = vpop.f32.mrf.mxu0
      %v2096 = vadd.f32 0.0, %v2095
      %v2097 = vpop.f32.mrf.mxu0
      %v2098 = vpop.f32.mrf.mxu0
      %v2099 = vadd.f32 0.0, %v2098
      %v2100 = vpop.f32.mrf.mxu0
      %2101 = vmatprep.mubr.bf16.mxu0 0
      %2102 = vmatmul.mubr.bf16.gmra.mxu0 %v1599
      %v2103 = vpop.f32.mrf.mxu0
      %v2104 = vadd.f32 0.0, %v2103
      %v2105 = vpop.f32.mrf.mxu0
      %v2106 = vpop.f32.mrf.mxu0
      %v2107 = vadd.f32 0.0, %v2106
      %v2108 = vpop.f32.mrf.mxu0
      %2109 = vmatprep.mubr.bf16.mxu0 0
      %2110 = vmatmul.mubr.bf16.gmra.mxu0 %v1600
      %v2111 = vpop.f32.mrf.mxu0
      %v2112 = vadd.f32 0.0, %v2111
      %v2113 = vpop.f32.mrf.mxu0
      %v2114 = vpop.f32.mrf.mxu0
      %v2115 = vadd.f32 0.0, %v2114
      %v2116 = vpop.f32.mrf.mxu0
      %2117 = vmatprep.mubr.bf16.mxu0 0
      %2118 = vmatmul.mubr.bf16.gmra.mxu0 %v1601
      %v2119 = vpop.f32.mrf.mxu0
      %v2120 = vadd.f32 0.0, %v2119
      %v2121 = vpop.f32.mrf.mxu0
      %v2122 = vpop.f32.mrf.mxu0
      %v2123 = vadd.f32 0.0, %v2122
      %v2124 = vpop.f32.mrf.mxu0
      %2125 = vmatprep.mubr.bf16.mxu0 0
      %2126 = vmatmul.mubr.bf16.gmra.mxu0 %v1790
      %v2127 = vpop.f32.mrf.mxu0
      %v2128 = vadd.f32 0.0, %v2127
      %v2129 = vpop.f32.mrf.mxu0
      %v2130 = vpop.f32.mrf.mxu0
      %v2131 = vadd.f32 0.0, %v2130
      %v2132 = vpop.f32.mrf.mxu0
      %2133 = vmatprep.mubr.bf16.mxu0 0
      %2134 = vmatmul.mubr.bf16.gmra.mxu0 %v1979
      %v2135 = vpop.f32.mrf.mxu0
      %v2136 = vadd.f32 0.0, %v2135
      %v2137 = vpop.f32.mrf.mxu0
      %v2138 = vpop.f32.mrf.mxu0
      %v2139 = vadd.f32 0.0, %v2138
      %v2140 = vpop.f32.mrf.mxu0
      %2141 = vdwg.mxu0
      %v2142 = vadd.f32 %v1953, %v2080
      %v2143 = vadd.f32 %v1954, %v2083
      %v2144 = vadd.f32 %v1955, %v2088
      %v2145 = vadd.f32 %v1956, %v2091
      %v2146 = vadd.f32 %v1957, %v2096
      %v2147 = vadd.f32 %v1958, %v2099
      %v2148 = vadd.f32 %v1959, %v2104
      %v2149 = vadd.f32 %v1960, %v2107
      %v2150 = vadd.f32 %v1961, %v2112
      %v2151 = vadd.f32 %v1962, %v2115
      %v2152 = vadd.f32 %v1963, %v2120
      %v2153 = vadd.f32 %v1964, %v2123
      %v2154 = vadd.f32 %v1965, %v2128
      %v2155 = vadd.f32 %v1966, %v2131
      %v2156 = vadd.f32 %v1967, %v2136
      %v2157 = vadd.f32 %v1968, %v2139
      %vm2158 = vcmask 1045504
      %v2159 = vrot.slane %v972, 2
      %v2160 = vrot.slane %v973, 2
      %v2161 = vsel %vm2158, %v2159, %v2160
      %v2162 = vrot.slane %v974, 2
      %v2163 = vsel %vm2158, %v2160, %v2162
      %v2164 = vrot.slane %v975, 2
      %v2165 = vrot.slane %v976, 2
      %v2166 = vsel %vm2158, %v2164, %v2165
      %v2167 = vrot.slane %v977, 2
      %v2168 = vsel %vm2158, %v2165, %v2167
      %v2169 = vrot.slane %v978, 2
      %v2170 = vrot.slane %v979, 2
      %v2171 = vsel %vm2158, %v2169, %v2170
      %v2172 = vrot.slane %v980, 2
      %v2173 = vsel %vm2158, %v2170, %v2172
      %v2174 = vrot.slane %v981, 2
      %v2175 = vrot.slane %v982, 2
      %v2176 = vsel %vm2158, %v2174, %v2175
      %v2177 = vrot.slane %v983, 2
      %v2178 = vsel %vm2158, %v2175, %v2177
      %v2179 = vrot.slane %v984, 2
      %v2180 = vrot.slane %v985, 2
      %v2181 = vsel %vm2158, %v2179, %v2180
      %v2182 = vrot.slane %v986, 2
      %v2183 = vsel %vm2158, %v2180, %v2182
      %v2184 = vrot.slane %v987, 2
      %v2185 = vrot.slane %v988, 2
      %v2186 = vsel %vm2158, %v2184, %v2185
      %v2187 = vrot.slane %v989, 2
      %v2188 = vsel %vm2158, %v2185, %v2187
      %v2189 = vrot.slane %v990, 2
      %v2190 = vrot.slane %v991, 2
      %v2191 = vsel %vm2158, %v2189, %v2190
      %v2192 = vrot.slane %v992, 2
      %v2193 = vsel %vm2158, %v2190, %v2192
      %v2194 = vrot.slane %v993, 2
      %v2195 = vrot.slane %v994, 2
      %v2196 = vsel %vm2158, %v2194, %v2195
      %v2197 = vrot.slane %v995, 2
      %v2198 = vsel %vm2158, %v2195, %v2197
      %v2215 = vpack.c.bf16 %v2163, %v2161
      %v2216 = vpack.c.bf16 %v2168, %v2166
      %v2217 = vpack.c.bf16 %v2173, %v2171
      %v2218 = vpack.c.bf16 %v2178, %v2176
      %v2219 = vpack.c.bf16 %v2183, %v2181
      %v2220 = vpack.c.bf16 %v2188, %v2186
      %v2221 = vpack.c.bf16 %v2193, %v2191
      %v2222 = vpack.c.bf16 %v2198, %v2196
      %s2223 = scalar_lea.vmem %s5, 128
      %v2224 = vld [vmem:[%s2223] sm:$0xf]
      %v2225 = vld [vmem:[%s2223 + $0x4] sm:$0xf]
      %v2226 = vld [vmem:[%s2223 + $0x8] sm:$0xf]
      %v2227 = vld [vmem:[%s2223 + $0xc] sm:$0xf]
      %v2228 = vld [vmem:[%s2223 + $0x10] sm:$0xf]
      %v2229 = vld [vmem:[%s2223 + $0x14] sm:$0xf]
      %v2230 = vld [vmem:[%s2223 + $0x18] sm:$0xf]
      %v2231 = vld [vmem:[%s2223 + $0x1c] sm:$0xf]
      %v2232 = vld [vmem:[%s2223 + $0x20] sm:$0xf]
      %v2233 = vld [vmem:[%s2223 + $0x24] sm:$0xf]
      %v2234 = vld [vmem:[%s2223 + $0x28] sm:$0xf]
      %v2235 = vld [vmem:[%s2223 + $0x2c] sm:$0xf]
      %v2236 = vld [vmem:[%s2223 + $0x30] sm:$0xf]
      %v2237 = vld [vmem:[%s2223 + $0x34] sm:$0xf]
      %v2238 = vld [vmem:[%s2223 + $0x38] sm:$0xf]
      %v2239 = vld [vmem:[%s2223 + $0x3c] sm:$0xf]
      %v2256 = vunpack.c.l.b16 %v2224
      %v2257 = vunpack.c.l.b16 %v2225
      %v2258 = vunpack.c.l.b16 %v2226
      %v2259 = vunpack.c.l.b16 %v2227
      %v2260 = vunpack.c.l.b16 %v2228
      %v2261 = vunpack.c.l.b16 %v2229
      %v2262 = vunpack.c.l.b16 %v2230
      %v2263 = vunpack.c.l.b16 %v2231
      %v2264 = vunpack.c.l.b16 %v2232
      %v2265 = vunpack.c.l.b16 %v2233
      %v2266 = vunpack.c.l.b16 %v2234
      %v2267 = vunpack.c.l.b16 %v2235
      %v2268 = vunpack.c.l.b16 %v2236
      %v2269 = vunpack.c.l.b16 %v2237
      %v2270 = vunpack.c.l.b16 %v2238
      %v2271 = vunpack.c.l.b16 %v2239
      %v2272 = vpack.c.b16 %v2257, %v2256
      %v2273 = vpack.c.b16 %v2259, %v2258
      %v2274 = vpack.c.b16 %v2261, %v2260
      %v2275 = vpack.c.b16 %v2263, %v2262
      %v2276 = vpack.c.b16 %v2265, %v2264
      %v2277 = vpack.c.b16 %v2267, %v2266
      %v2278 = vpack.c.b16 %v2269, %v2268
      %v2279 = vpack.c.b16 %v2271, %v2270
      %2288 = vmatprep.subr.bf16.mxu0 0
      %2289 = vmatpush1.bf16.msra.mxu0 %v2279
      %2290 = vmatprep.subr.bf16.mxu0 0
      %2291 = vmatpush1.bf16.msra.mxu0 %v2278
      %2292 = vmatprep.subr.bf16.mxu0 0
      %2293 = vmatpush1.bf16.msra.mxu0 %v2277
      %2294 = vmatprep.subr.bf16.mxu0 0
      %2295 = vmatpush1.bf16.msra.mxu0 %v2276
      %2296 = vmatprep.subr.bf16.mxu0 0
      %2297 = vmatpush1.bf16.msra.mxu0 %v2275
      %2298 = vmatprep.subr.bf16.mxu0 0
      %2299 = vmatpush1.bf16.msra.mxu0 %v2274
      %2300 = vmatprep.subr.bf16.mxu0 0
      %2301 = vmatpush1.bf16.msra.mxu0 %v2273
      %2302 = vmatprep.subr.bf16.mxu0 0
      %2303 = vmatpush1.bf16.msra.mxu0 %v2272
      %2304 = vmatprep.subr.bf16.mxu0 0
      %2305 = vmatpush2.bf16.msra.mxu0 0
      %2306 = vmatprep.subr.bf16.mxu0 0
      %2307 = vmatpush2.bf16.msra.mxu0 0
      %2308 = vmatprep.subr.bf16.mxu0 0
      %2309 = vmatpush2.bf16.msra.mxu0 0
      %2310 = vmatprep.subr.bf16.mxu0 0
      %2311 = vmatpush2.bf16.msra.mxu0 0
      %2312 = vmatprep.subr.bf16.mxu0 0
      %2313 = vmatpush2.bf16.msra.mxu0 0
      %2314 = vmatprep.subr.bf16.mxu0 0
      %2315 = vmatpush2.bf16.msra.mxu0 0
      %2316 = vmatprep.subr.bf16.mxu0 0
      %2317 = vmatpush2.bf16.msra.mxu0 0
      %2318 = vmatprep.subr.bf16.mxu0 0
      %2319 = vmatpush2.bf16.msra.mxu0 0
      %2320 = vmatprep.mubr.bf16.mxu0 0
      %2321 = vmatmul.mubr.bf16.gmra.mxu0 %v2215
      %v2322 = vpop.f32.mrf.mxu0
      %v2323 = vadd.f32 0.0, %v2322
      %v2324 = vpop.f32.mrf.mxu0
      %v2325 = vpop.f32.mrf.mxu0
      %v2326 = vadd.f32 0.0, %v2325
      %v2327 = vpop.f32.mrf.mxu0
      %2328 = vmatprep.mubr.bf16.mxu0 0
      %2329 = vmatmul.mubr.bf16.gmra.mxu0 %v2216
      %v2330 = vpop.f32.mrf.mxu0
      %v2331 = vadd.f32 0.0, %v2330
      %v2332 = vpop.f32.mrf.mxu0
      %v2333 = vpop.f32.mrf.mxu0
      %v2334 = vadd.f32 0.0, %v2333
      %v2335 = vpop.f32.mrf.mxu0
      %2336 = vmatprep.mubr.bf16.mxu0 0
      %2337 = vmatmul.mubr.bf16.gmra.mxu0 %v2217
      %v2338 = vpop.f32.mrf.mxu0
      %v2339 = vadd.f32 0.0, %v2338
      %v2340 = vpop.f32.mrf.mxu0
      %v2341 = vpop.f32.mrf.mxu0
      %v2342 = vadd.f32 0.0, %v2341
      %v2343 = vpop.f32.mrf.mxu0
      %2344 = vmatprep.mubr.bf16.mxu0 0
      %2345 = vmatmul.mubr.bf16.gmra.mxu0 %v2218
      %v2346 = vpop.f32.mrf.mxu0
      %v2347 = vadd.f32 0.0, %v2346
      %v2348 = vpop.f32.mrf.mxu0
      %v2349 = vpop.f32.mrf.mxu0
      %v2350 = vadd.f32 0.0, %v2349
      %v2351 = vpop.f32.mrf.mxu0
      %2352 = vmatprep.mubr.bf16.mxu0 0
      %2353 = vmatmul.mubr.bf16.gmra.mxu0 %v2219
      %v2354 = vpop.f32.mrf.mxu0
      %v2355 = vadd.f32 0.0, %v2354
      %v2356 = vpop.f32.mrf.mxu0
      %v2357 = vpop.f32.mrf.mxu0
      %v2358 = vadd.f32 0.0, %v2357
      %v2359 = vpop.f32.mrf.mxu0
      %2360 = vmatprep.mubr.bf16.mxu0 0
      %2361 = vmatmul.mubr.bf16.gmra.mxu0 %v2220
      %v2362 = vpop.f32.mrf.mxu0
      %v2363 = vadd.f32 0.0, %v2362
      %v2364 = vpop.f32.mrf.mxu0
      %v2365 = vpop.f32.mrf.mxu0
      %v2366 = vadd.f32 0.0, %v2365
      %v2367 = vpop.f32.mrf.mxu0
      %2368 = vmatprep.mubr.bf16.mxu0 0
      %2369 = vmatmul.mubr.bf16.gmra.mxu0 %v2221
      %v2370 = vpop.f32.mrf.mxu0
      %v2371 = vadd.f32 0.0, %v2370
      %v2372 = vpop.f32.mrf.mxu0
      %v2373 = vpop.f32.mrf.mxu0
      %v2374 = vadd.f32 0.0, %v2373
      %v2375 = vpop.f32.mrf.mxu0
      %2376 = vmatprep.mubr.bf16.mxu0 0
      %2377 = vmatmul.mubr.bf16.gmra.mxu0 %v2222
      %v2378 = vpop.f32.mrf.mxu0
      %v2379 = vadd.f32 0.0, %v2378
      %v2380 = vpop.f32.mrf.mxu0
      %v2381 = vpop.f32.mrf.mxu0
      %v2382 = vadd.f32 0.0, %v2381
      %v2383 = vpop.f32.mrf.mxu0
      %2384 = vdwg.mxu0
      %v2385 = vadd.f32 %v2142, %v2323
      %v2386 = vadd.f32 %v2143, %v2326
      %v2387 = vadd.f32 %v2144, %v2331
      %v2388 = vadd.f32 %v2145, %v2334
      %v2389 = vadd.f32 %v2146, %v2339
      %v2390 = vadd.f32 %v2147, %v2342
      %v2391 = vadd.f32 %v2148, %v2347
      %v2392 = vadd.f32 %v2149, %v2350
      %v2393 = vadd.f32 %v2150, %v2355
      %v2394 = vadd.f32 %v2151, %v2358
      %v2395 = vadd.f32 %v2152, %v2363
      %v2396 = vadd.f32 %v2153, %v2366
      %v2397 = vadd.f32 %v2154, %v2371
      %v2398 = vadd.f32 %v2155, %v2374
      %v2399 = vadd.f32 %v2156, %v2379
      %v2400 = vadd.f32 %v2157, %v2382
      %v2401 = vrot.slane %v996, 2
      %v2402 = vrot.slane %v997, 2
      %v2403 = vsel %vm2158, %v2401, %v2402
      %v2404 = vrot.slane %v998, 2
      %v2405 = vsel %vm2158, %v2402, %v2404
      %v2408 = vpack.c.bf16 %v2405, %v2403
      %s2409 = scalar_lea.vmem %s5, 320
      %v2410 = vld [vmem:[%s2409] sm:$0xf]
      %v2411 = vld [vmem:[%s2409 + $0x4] sm:$0xf]
      %v2412 = vld [vmem:[%s2409 + $0x8] sm:$0xf]
      %v2413 = vld [vmem:[%s2409 + $0xc] sm:$0xf]
      %v2414 = vld [vmem:[%s2409 + $0x10] sm:$0xf]
      %v2415 = vld [vmem:[%s2409 + $0x14] sm:$0xf]
      %v2416 = vld [vmem:[%s2409 + $0x18] sm:$0xf]
      %v2417 = vld [vmem:[%s2409 + $0x1c] sm:$0xf]
      %v2418 = vld [vmem:[%s2409 + $0x20] sm:$0xf]
      %v2419 = vld [vmem:[%s2409 + $0x24] sm:$0xf]
      %v2420 = vld [vmem:[%s2409 + $0x28] sm:$0xf]
      %v2421 = vld [vmem:[%s2409 + $0x2c] sm:$0xf]
      %v2422 = vld [vmem:[%s2409 + $0x30] sm:$0xf]
      %v2423 = vld [vmem:[%s2409 + $0x34] sm:$0xf]
      %v2424 = vld [vmem:[%s2409 + $0x38] sm:$0xf]
      %v2425 = vld [vmem:[%s2409 + $0x3c] sm:$0xf]
      %v2442 = vunpack.c.l.b16 %v2410
      %v2443 = vunpack.c.l.b16 %v2411
      %v2444 = vunpack.c.l.b16 %v2412
      %v2445 = vunpack.c.l.b16 %v2413
      %v2446 = vunpack.c.l.b16 %v2414
      %v2447 = vunpack.c.l.b16 %v2415
      %v2448 = vunpack.c.l.b16 %v2416
      %v2449 = vunpack.c.l.b16 %v2417
      %v2450 = vunpack.c.l.b16 %v2418
      %v2451 = vunpack.c.l.b16 %v2419
      %v2452 = vunpack.c.l.b16 %v2420
      %v2453 = vunpack.c.l.b16 %v2421
      %v2454 = vunpack.c.l.b16 %v2422
      %v2455 = vunpack.c.l.b16 %v2423
      %v2456 = vunpack.c.l.b16 %v2424
      %v2457 = vunpack.c.l.b16 %v2425
      %v2458 = vpack.c.b16 %v2443, %v2442
      %v2459 = vpack.c.b16 %v2445, %v2444
      %v2460 = vpack.c.b16 %v2447, %v2446
      %v2461 = vpack.c.b16 %v2449, %v2448
      %v2462 = vpack.c.b16 %v2451, %v2450
      %v2463 = vpack.c.b16 %v2453, %v2452
      %v2464 = vpack.c.b16 %v2455, %v2454
      %v2465 = vpack.c.b16 %v2457, %v2456
      %2474 = vmatprep.subr.bf16.mxu0 0
      %2475 = vmatpush1.bf16.msra.mxu0 %v2465
      %2476 = vmatprep.subr.bf16.mxu0 0
      %2477 = vmatpush1.bf16.msra.mxu0 %v2464
      %2478 = vmatprep.subr.bf16.mxu0 0
      %2479 = vmatpush1.bf16.msra.mxu0 %v2463
      %2480 = vmatprep.subr.bf16.mxu0 0
      %2481 = vmatpush1.bf16.msra.mxu0 %v2462
      %2482 = vmatprep.subr.bf16.mxu0 0
      %2483 = vmatpush1.bf16.msra.mxu0 %v2461
      %2484 = vmatprep.subr.bf16.mxu0 0
      %2485 = vmatpush1.bf16.msra.mxu0 %v2460
      %2486 = vmatprep.subr.bf16.mxu0 0
      %2487 = vmatpush1.bf16.msra.mxu0 %v2459
      %2488 = vmatprep.subr.bf16.mxu0 0
      %2489 = vmatpush1.bf16.msra.mxu0 %v2458
      %2490 = vmatprep.subr.bf16.mxu0 0
      %2491 = vmatpush2.bf16.msra.mxu0 0
      %2492 = vmatprep.subr.bf16.mxu0 0
      %2493 = vmatpush2.bf16.msra.mxu0 0
      %2494 = vmatprep.subr.bf16.mxu0 0
      %2495 = vmatpush2.bf16.msra.mxu0 0
      %2496 = vmatprep.subr.bf16.mxu0 0
      %2497 = vmatpush2.bf16.msra.mxu0 0
      %2498 = vmatprep.subr.bf16.mxu0 0
      %2499 = vmatpush2.bf16.msra.mxu0 0
      %2500 = vmatprep.subr.bf16.mxu0 0
      %2501 = vmatpush2.bf16.msra.mxu0 0
      %2502 = vmatprep.subr.bf16.mxu0 0
      %2503 = vmatpush2.bf16.msra.mxu0 0
      %2504 = vmatprep.subr.bf16.mxu0 0
      %2505 = vmatpush2.bf16.msra.mxu0 0
      %2506 = vmatprep.mubr.bf16.mxu0 0
      %2507 = vmatmul.mubr.bf16.gmra.mxu0 %v2216
      %v2508 = vpop.f32.mrf.mxu0
      %v2509 = vadd.f32 0.0, %v2508
      %v2510 = vpop.f32.mrf.mxu0
      %v2511 = vpop.f32.mrf.mxu0
      %v2512 = vadd.f32 0.0, %v2511
      %v2513 = vpop.f32.mrf.mxu0
      %2514 = vmatprep.mubr.bf16.mxu0 0
      %2515 = vmatmul.mubr.bf16.gmra.mxu0 %v2217
      %v2516 = vpop.f32.mrf.mxu0
      %v2517 = vadd.f32 0.0, %v2516
      %v2518 = vpop.f32.mrf.mxu0
      %v2519 = vpop.f32.mrf.mxu0
      %v2520 = vadd.f32 0.0, %v2519
      %v2521 = vpop.f32.mrf.mxu0
      %2522 = vmatprep.mubr.bf16.mxu0 0
      %2523 = vmatmul.mubr.bf16.gmra.mxu0 %v2218
      %v2524 = vpop.f32.mrf.mxu0
      %v2525 = vadd.f32 0.0, %v2524
      %v2526 = vpop.f32.mrf.mxu0
      %v2527 = vpop.f32.mrf.mxu0
      %v2528 = vadd.f32 0.0, %v2527
      %v2529 = vpop.f32.mrf.mxu0
      %2530 = vmatprep.mubr.bf16.mxu0 0
      %2531 = vmatmul.mubr.bf16.gmra.mxu0 %v2219
      %v2532 = vpop.f32.mrf.mxu0
      %v2533 = vadd.f32 0.0, %v2532
      %v2534 = vpop.f32.mrf.mxu0
      %v2535 = vpop.f32.mrf.mxu0
      %v2536 = vadd.f32 0.0, %v2535
      %v2537 = vpop.f32.mrf.mxu0
      %2538 = vmatprep.mubr.bf16.mxu0 0
      %2539 = vmatmul.mubr.bf16.gmra.mxu0 %v2220
      %v2540 = vpop.f32.mrf.mxu0
      %v2541 = vadd.f32 0.0, %v2540
      %v2542 = vpop.f32.mrf.mxu0
      %v2543 = vpop.f32.mrf.mxu0
      %v2544 = vadd.f32 0.0, %v2543
      %v2545 = vpop.f32.mrf.mxu0
      %2546 = vmatprep.mubr.bf16.mxu0 0
      %2547 = vmatmul.mubr.bf16.gmra.mxu0 %v2221
      %v2548 = vpop.f32.mrf.mxu0
      %v2549 = vadd.f32 0.0, %v2548
      %v2550 = vpop.f32.mrf.mxu0
      %v2551 = vpop.f32.mrf.mxu0
      %v2552 = vadd.f32 0.0, %v2551
      %v2553 = vpop.f32.mrf.mxu0
      %2554 = vmatprep.mubr.bf16.mxu0 0
      %2555 = vmatmul.mubr.bf16.gmra.mxu0 %v2222
      %v2556 = vpop.f32.mrf.mxu0
      %v2557 = vadd.f32 0.0, %v2556
      %v2558 = vpop.f32.mrf.mxu0
      %v2559 = vpop.f32.mrf.mxu0
      %v2560 = vadd.f32 0.0, %v2559
      %v2561 = vpop.f32.mrf.mxu0
      %2562 = vmatprep.mubr.bf16.mxu0 0
      %2563 = vmatmul.mubr.bf16.gmra.mxu0 %v2408
      %v2564 = vpop.f32.mrf.mxu0
      %v2565 = vadd.f32 0.0, %v2564
      %v2566 = vpop.f32.mrf.mxu0
      %v2567 = vpop.f32.mrf.mxu0
      %v2568 = vadd.f32 0.0, %v2567
      %v2569 = vpop.f32.mrf.mxu0
      %2570 = vdwg.mxu0
      %v2571 = vadd.f32 %v2385, %v2509
      %v2572 = vadd.f32 %v2386, %v2512
      %v2573 = vadd.f32 %v2387, %v2517
      %v2574 = vadd.f32 %v2388, %v2520
      %v2575 = vadd.f32 %v2389, %v2525
      %v2576 = vadd.f32 %v2390, %v2528
      %v2577 = vadd.f32 %v2391, %v2533
      %v2578 = vadd.f32 %v2392, %v2536
      %v2579 = vadd.f32 %v2393, %v2541
      %v2580 = vadd.f32 %v2394, %v2544
      %v2581 = vadd.f32 %v2395, %v2549
      %v2582 = vadd.f32 %v2396, %v2552
      %v2583 = vadd.f32 %v2397, %v2557
      %v2584 = vadd.f32 %v2398, %v2560
      %v2585 = vadd.f32 %v2399, %v2565
      %v2586 = vadd.f32 %v2400, %v2568
      %v2587 = vrot.slane %v999, 2
      %v2588 = vrot.slane %v1000, 2
      %v2589 = vsel %vm2158, %v2587, %v2588
      %v2590 = vrot.slane %v1001, 2
      %v2591 = vsel %vm2158, %v2588, %v2590
      %v2594 = vpack.c.bf16 %v2591, %v2589
      %s2595 = scalar_lea.vmem %s5, 512
      %v2596 = vld [vmem:[%s2595] sm:$0xf]
      %v2597 = vld [vmem:[%s2595 + $0x4] sm:$0xf]
      %v2598 = vld [vmem:[%s2595 + $0x8] sm:$0xf]
      %v2599 = vld [vmem:[%s2595 + $0xc] sm:$0xf]
      %v2600 = vld [vmem:[%s2595 + $0x10] sm:$0xf]
      %v2601 = vld [vmem:[%s2595 + $0x14] sm:$0xf]
      %v2602 = vld [vmem:[%s2595 + $0x18] sm:$0xf]
      %v2603 = vld [vmem:[%s2595 + $0x1c] sm:$0xf]
      %v2604 = vld [vmem:[%s2595 + $0x20] sm:$0xf]
      %v2605 = vld [vmem:[%s2595 + $0x24] sm:$0xf]
      %v2606 = vld [vmem:[%s2595 + $0x28] sm:$0xf]
      %v2607 = vld [vmem:[%s2595 + $0x2c] sm:$0xf]
      %v2608 = vld [vmem:[%s2595 + $0x30] sm:$0xf]
      %v2609 = vld [vmem:[%s2595 + $0x34] sm:$0xf]
      %v2610 = vld [vmem:[%s2595 + $0x38] sm:$0xf]
      %v2611 = vld [vmem:[%s2595 + $0x3c] sm:$0xf]
      %v2628 = vunpack.c.l.b16 %v2596
      %v2629 = vunpack.c.l.b16 %v2597
      %v2630 = vunpack.c.l.b16 %v2598
      %v2631 = vunpack.c.l.b16 %v2599
      %v2632 = vunpack.c.l.b16 %v2600
      %v2633 = vunpack.c.l.b16 %v2601
      %v2634 = vunpack.c.l.b16 %v2602
      %v2635 = vunpack.c.l.b16 %v2603
      %v2636 = vunpack.c.l.b16 %v2604
      %v2637 = vunpack.c.l.b16 %v2605
      %v2638 = vunpack.c.l.b16 %v2606
      %v2639 = vunpack.c.l.b16 %v2607
      %v2640 = vunpack.c.l.b16 %v2608
      %v2641 = vunpack.c.l.b16 %v2609
      %v2642 = vunpack.c.l.b16 %v2610
      %v2643 = vunpack.c.l.b16 %v2611
      %v2644 = vpack.c.b16 %v2629, %v2628
      %v2645 = vpack.c.b16 %v2631, %v2630
      %v2646 = vpack.c.b16 %v2633, %v2632
      %v2647 = vpack.c.b16 %v2635, %v2634
      %v2648 = vpack.c.b16 %v2637, %v2636
      %v2649 = vpack.c.b16 %v2639, %v2638
      %v2650 = vpack.c.b16 %v2641, %v2640
      %v2651 = vpack.c.b16 %v2643, %v2642
      %2660 = vmatprep.subr.bf16.mxu0 0
      %2661 = vmatpush1.bf16.msra.mxu0 %v2651
      %2662 = vmatprep.subr.bf16.mxu0 0
      %2663 = vmatpush1.bf16.msra.mxu0 %v2650
      %2664 = vmatprep.subr.bf16.mxu0 0
      %2665 = vmatpush1.bf16.msra.mxu0 %v2649
      %2666 = vmatprep.subr.bf16.mxu0 0
      %2667 = vmatpush1.bf16.msra.mxu0 %v2648
      %2668 = vmatprep.subr.bf16.mxu0 0
      %2669 = vmatpush1.bf16.msra.mxu0 %v2647
      %2670 = vmatprep.subr.bf16.mxu0 0
      %2671 = vmatpush1.bf16.msra.mxu0 %v2646
      %2672 = vmatprep.subr.bf16.mxu0 0
      %2673 = vmatpush1.bf16.msra.mxu0 %v2645
      %2674 = vmatprep.subr.bf16.mxu0 0
      %2675 = vmatpush1.bf16.msra.mxu0 %v2644
      %2676 = vmatprep.subr.bf16.mxu0 0
      %2677 = vmatpush2.bf16.msra.mxu0 0
      %2678 = vmatprep.subr.bf16.mxu0 0
      %2679 = vmatpush2.bf16.msra.mxu0 0
      %2680 = vmatprep.subr.bf16.mxu0 0
      %2681 = vmatpush2.bf16.msra.mxu0 0
      %2682 = vmatprep.subr.bf16.mxu0 0
      %2683 = vmatpush2.bf16.msra.mxu0 0
      %2684 = vmatprep.subr.bf16.mxu0 0
      %2685 = vmatpush2.bf16.msra.mxu0 0
      %2686 = vmatprep.subr.bf16.mxu0 0
      %2687 = vmatpush2.bf16.msra.mxu0 0
      %2688 = vmatprep.subr.bf16.mxu0 0
      %2689 = vmatpush2.bf16.msra.mxu0 0
      %2690 = vmatprep.subr.bf16.mxu0 0
      %2691 = vmatpush2.bf16.msra.mxu0 0
      %2692 = vmatprep.mubr.bf16.mxu0 0
      %2693 = vmatmul.mubr.bf16.gmra.mxu0 %v2217
      %v2694 = vpop.f32.mrf.mxu0
      %v2695 = vadd.f32 0.0, %v2694
      %v2696 = vpop.f32.mrf.mxu0
      %v2697 = vpop.f32.mrf.mxu0
      %v2698 = vadd.f32 0.0, %v2697
      %v2699 = vpop.f32.mrf.mxu0
      %2700 = vmatprep.mubr.bf16.mxu0 0
      %2701 = vmatmul.mubr.bf16.gmra.mxu0 %v2218
      %v2702 = vpop.f32.mrf.mxu0
      %v2703 = vadd.f32 0.0, %v2702
      %v2704 = vpop.f32.mrf.mxu0
      %v2705 = vpop.f32.mrf.mxu0
      %v2706 = vadd.f32 0.0, %v2705
      %v2707 = vpop.f32.mrf.mxu0
      %2708 = vmatprep.mubr.bf16.mxu0 0
      %2709 = vmatmul.mubr.bf16.gmra.mxu0 %v2219
      %v2710 = vpop.f32.mrf.mxu0
      %v2711 = vadd.f32 0.0, %v2710
      %v2712 = vpop.f32.mrf.mxu0
      %v2713 = vpop.f32.mrf.mxu0
      %v2714 = vadd.f32 0.0, %v2713
      %v2715 = vpop.f32.mrf.mxu0
      %2716 = vmatprep.mubr.bf16.mxu0 0
      %2717 = vmatmul.mubr.bf16.gmra.mxu0 %v2220
      %v2718 = vpop.f32.mrf.mxu0
      %v2719 = vadd.f32 0.0, %v2718
      %v2720 = vpop.f32.mrf.mxu0
      %v2721 = vpop.f32.mrf.mxu0
      %v2722 = vadd.f32 0.0, %v2721
      %v2723 = vpop.f32.mrf.mxu0
      %2724 = vmatprep.mubr.bf16.mxu0 0
      %2725 = vmatmul.mubr.bf16.gmra.mxu0 %v2221
      %v2726 = vpop.f32.mrf.mxu0
      %v2727 = vadd.f32 0.0, %v2726
      %v2728 = vpop.f32.mrf.mxu0
      %v2729 = vpop.f32.mrf.mxu0
      %v2730 = vadd.f32 0.0, %v2729
      %v2731 = vpop.f32.mrf.mxu0
      %2732 = vmatprep.mubr.bf16.mxu0 0
      %2733 = vmatmul.mubr.bf16.gmra.mxu0 %v2222
      %v2734 = vpop.f32.mrf.mxu0
      %v2735 = vadd.f32 0.0, %v2734
      %v2736 = vpop.f32.mrf.mxu0
      %v2737 = vpop.f32.mrf.mxu0
      %v2738 = vadd.f32 0.0, %v2737
      %v2739 = vpop.f32.mrf.mxu0
      %2740 = vmatprep.mubr.bf16.mxu0 0
      %2741 = vmatmul.mubr.bf16.gmra.mxu0 %v2408
      %v2742 = vpop.f32.mrf.mxu0
      %v2743 = vadd.f32 0.0, %v2742
      %v2744 = vpop.f32.mrf.mxu0
      %v2745 = vpop.f32.mrf.mxu0
      %v2746 = vadd.f32 0.0, %v2745
      %v2747 = vpop.f32.mrf.mxu0
      %2748 = vmatprep.mubr.bf16.mxu0 0
      %2749 = vmatmul.mubr.bf16.gmra.mxu0 %v2594
      %v2750 = vpop.f32.mrf.mxu0
      %v2751 = vadd.f32 0.0, %v2750
      %v2752 = vpop.f32.mrf.mxu0
      %v2753 = vpop.f32.mrf.mxu0
      %v2754 = vadd.f32 0.0, %v2753
      %v2755 = vpop.f32.mrf.mxu0
      %2756 = vdwg.mxu0
      %v2757 = vadd.f32 %v2571, %v2695
      %v2758 = vadd.f32 %v2572, %v2698
      %v2759 = vadd.f32 %v2573, %v2703
      %v2760 = vadd.f32 %v2574, %v2706
      %v2761 = vadd.f32 %v2575, %v2711
      %v2762 = vadd.f32 %v2576, %v2714
      %v2763 = vadd.f32 %v2577, %v2719
      %v2764 = vadd.f32 %v2578, %v2722
      %v2765 = vadd.f32 %v2579, %v2727
      %v2766 = vadd.f32 %v2580, %v2730
      %v2767 = vadd.f32 %v2581, %v2735
      %v2768 = vadd.f32 %v2582, %v2738
      %v2769 = vadd.f32 %v2583, %v2743
      %v2770 = vadd.f32 %v2584, %v2746
      %v2771 = vadd.f32 %v2585, %v2751
      %v2772 = vadd.f32 %v2586, %v2754
      %v2773 = vld [vmem:[%s6] sm:$0x1]
      %v2775 = vlaneseq
      %v2776 = vshrl.u32 %v2775, 7
      %v2777 = vsub.s32 0, %v2776
      %v2778 = vrot.slane %v2773, %v2777
      %v2780 = vadd.f32 %v2757, %v2778
      %v2781 = vadd.f32 %v2758, %v2778
      %v2782 = vadd.f32 %v2759, %v2778
      %v2783 = vadd.f32 %v2760, %v2778
      %v2784 = vadd.f32 %v2761, %v2778
      %v2785 = vadd.f32 %v2762, %v2778
      %v2786 = vadd.f32 %v2763, %v2778
      %v2787 = vadd.f32 %v2764, %v2778
      %v2788 = vadd.f32 %v2765, %v2778
      %v2789 = vadd.f32 %v2766, %v2778
      %v2790 = vadd.f32 %v2767, %v2778
      %v2791 = vadd.f32 %v2768, %v2778
      %v2792 = vadd.f32 %v2769, %v2778
      %v2793 = vadd.f32 %v2770, %v2778
      %v2794 = vadd.f32 %v2771, %v2778
      %v2795 = vadd.f32 %v2772, %v2778
      %v2796 = vld [vmem:[%s400] sm:$0xff]
      %v2797 = vld [vmem:[%s400 + $0x8] sm:$0xff]
      %v2798 = vld [vmem:[%s400 + $0x10] sm:$0xff]
      %v2799 = vld [vmem:[%s400 + $0x18] sm:$0xff]
      %v2800 = vld [vmem:[%s400 + $0x20] sm:$0xff]
      %v2801 = vld [vmem:[%s400 + $0x28] sm:$0xff]
      %v2802 = vld [vmem:[%s400 + $0x30] sm:$0xff]
      %v2803 = vld [vmem:[%s400 + $0x38] sm:$0xff]
      %v2804 = vld [vmem:[%s400 + $0x40] sm:$0xff]
      %v2805 = vld [vmem:[%s400 + $0x48] sm:$0xff]
      %v2806 = vld [vmem:[%s400 + $0x50] sm:$0xff]
      %v2807 = vld [vmem:[%s400 + $0x58] sm:$0xff]
      %v2808 = vld [vmem:[%s400 + $0x60] sm:$0xff]
      %v2809 = vld [vmem:[%s400 + $0x68] sm:$0xff]
      %v2810 = vld [vmem:[%s400 + $0x70] sm:$0xff]
      %v2811 = vld [vmem:[%s400 + $0x78] sm:$0xff]
      %v2812 = vld [vmem:[%s7] sm:$0x1]
      %v2814 = vlaneseq
      %v2815 = vshrl.u32 %v2814, 7
      %v2816 = vsub.s32 0, %v2815
      %v2817 = vrot.slane %v2812, %v2816
      %v2819 = vsub.f32 %v2796, %v2817
      %v2820 = vsub.f32 %v2797, %v2817
      %v2821 = vsub.f32 %v2798, %v2817
      %v2822 = vsub.f32 %v2799, %v2817
      %v2823 = vsub.f32 %v2800, %v2817
      %v2824 = vsub.f32 %v2801, %v2817
      %v2825 = vsub.f32 %v2802, %v2817
      %v2826 = vsub.f32 %v2803, %v2817
      %v2827 = vsub.f32 %v2804, %v2817
      %v2828 = vsub.f32 %v2805, %v2817
      %v2829 = vsub.f32 %v2806, %v2817
      %v2830 = vsub.f32 %v2807, %v2817
      %v2831 = vsub.f32 %v2808, %v2817
      %v2832 = vsub.f32 %v2809, %v2817
      %v2833 = vsub.f32 %v2810, %v2817
      %v2834 = vsub.f32 %v2811, %v2817
      %v2835 = vld [vmem:[%s8] sm:$0x1]
      %v2837 = vlaneseq
      %v2838 = vshrl.u32 %v2837, 7
      %v2839 = vsub.s32 0, %v2838
      %v2840 = vrot.slane %v2835, %v2839
      %v2842 = vmul.f32 %v2819, %v2840
      %v2843 = vmul.f32 %v2820, %v2840
      %v2844 = vmul.f32 %v2821, %v2840
      %v2845 = vmul.f32 %v2822, %v2840
      %v2846 = vmul.f32 %v2823, %v2840
      %v2847 = vmul.f32 %v2824, %v2840
      %v2848 = vmul.f32 %v2825, %v2840
      %v2849 = vmul.f32 %v2826, %v2840
      %v2850 = vmul.f32 %v2827, %v2840
      %v2851 = vmul.f32 %v2828, %v2840
      %v2852 = vmul.f32 %v2829, %v2840
      %v2853 = vmul.f32 %v2830, %v2840
      %v2854 = vmul.f32 %v2831, %v2840
      %v2855 = vmul.f32 %v2832, %v2840
      %v2856 = vmul.f32 %v2833, %v2840
      %v2857 = vmul.f32 %v2834, %v2840
      %v2858 = vadd.f32 %v2780, 1.0
      %v2859 = vadd.f32 %v2781, 1.0
      %v2860 = vadd.f32 %v2782, 1.0
      %v2861 = vadd.f32 %v2783, 1.0
      %v2862 = vadd.f32 %v2784, 1.0
      %v2863 = vadd.f32 %v2785, 1.0
      %v2864 = vadd.f32 %v2786, 1.0
      %v2865 = vadd.f32 %v2787, 1.0
      %v2866 = vadd.f32 %v2788, 1.0
      %v2867 = vadd.f32 %v2789, 1.0
      %v2868 = vadd.f32 %v2790, 1.0
      %v2869 = vadd.f32 %v2791, 1.0
      %v2870 = vadd.f32 %v2792, 1.0
      %v2871 = vadd.f32 %v2793, 1.0
      %v2872 = vadd.f32 %v2794, 1.0
      %v2873 = vadd.f32 %v2795, 1.0
      %v2874 = vmul.f32 %v2842, %v2858
      %v2875 = vmul.f32 %v2843, %v2859
      %v2876 = vmul.f32 %v2844, %v2860
      %v2877 = vmul.f32 %v2845, %v2861
      %v2878 = vmul.f32 %v2846, %v2862
      %v2879 = vmul.f32 %v2847, %v2863
      %v2880 = vmul.f32 %v2848, %v2864
      %v2881 = vmul.f32 %v2849, %v2865
      %v2882 = vmul.f32 %v2850, %v2866
      %v2883 = vmul.f32 %v2851, %v2867
      %v2884 = vmul.f32 %v2852, %v2868
      %v2885 = vmul.f32 %v2853, %v2869
      %v2886 = vmul.f32 %v2854, %v2870
      %v2887 = vmul.f32 %v2855, %v2871
      %v2888 = vmul.f32 %v2856, %v2872
      %v2889 = vmul.f32 %v2857, %v2873
      %2906 = vrot.lane.b32.xlu0 %v2780, 124
      %v2907 = vpop.permute.xlu0 %2906
      %2908 = vrot.lane.b32.xlu0 %v2781, 124
      %v2909 = vpop.permute.xlu0 %2908
      %2910 = vrot.lane.b32.xlu0 %v2782, 124
      %v2911 = vpop.permute.xlu0 %2910
      %2912 = vrot.lane.b32.xlu0 %v2783, 124
      %v2913 = vpop.permute.xlu0 %2912
      %2914 = vrot.lane.b32.xlu0 %v2784, 124
      %v2915 = vpop.permute.xlu0 %2914
      %2916 = vrot.lane.b32.xlu0 %v2785, 124
      %v2917 = vpop.permute.xlu0 %2916
      %2918 = vrot.lane.b32.xlu0 %v2786, 124
      %v2919 = vpop.permute.xlu0 %2918
      %2920 = vrot.lane.b32.xlu0 %v2787, 124
      %v2921 = vpop.permute.xlu0 %2920
      %2922 = vrot.lane.b32.xlu0 %v2788, 124
      %v2923 = vpop.permute.xlu0 %2922
      %2924 = vrot.lane.b32.xlu0 %v2789, 124
      %v2925 = vpop.permute.xlu0 %2924
      %2926 = vrot.lane.b32.xlu0 %v2790, 124
      %v2927 = vpop.permute.xlu0 %2926
      %2928 = vrot.lane.b32.xlu0 %v2791, 124
      %v2929 = vpop.permute.xlu0 %2928
      %2930 = vrot.lane.b32.xlu0 %v2792, 124
      %v2931 = vpop.permute.xlu0 %2930
      %2932 = vrot.lane.b32.xlu0 %v2793, 124
      %v2933 = vpop.permute.xlu0 %2932
      %2934 = vrot.lane.b32.xlu0 %v2794, 124
      %v2935 = vpop.permute.xlu0 %2934
      %2936 = vrot.lane.b32.xlu0 %v2795, 124
      %v2937 = vpop.permute.xlu0 %2936
      %v2954 = vadd.f32 %v2874, %v2907
      %v2955 = vadd.f32 %v2875, %v2909
      %v2956 = vadd.f32 %v2876, %v2911
      %v2957 = vadd.f32 %v2877, %v2913
      %v2958 = vadd.f32 %v2878, %v2915
      %v2959 = vadd.f32 %v2879, %v2917
      %v2960 = vadd.f32 %v2880, %v2919
      %v2961 = vadd.f32 %v2881, %v2921
      %v2962 = vadd.f32 %v2882, %v2923
      %v2963 = vadd.f32 %v2883, %v2925
      %v2964 = vadd.f32 %v2884, %v2927
      %v2965 = vadd.f32 %v2885, %v2929
      %v2966 = vadd.f32 %v2886, %v2931
      %v2967 = vadd.f32 %v2887, %v2933
      %v2968 = vadd.f32 %v2888, %v2935
      %v2969 = vadd.f32 %v2889, %v2937
      %vm2970 = vcmask 31744
      %2971 = vst.msk [vmem:[%s424] sm:$0xff] %vm2970, %v2954
      %2972 = vst.msk [vmem:[%s424 + $0x8] sm:$0xff] %vm2970, %v2955
      %2973 = vst.msk [vmem:[%s424 + $0x10] sm:$0xff] %vm2970, %v2956
      %2974 = vst.msk [vmem:[%s424 + $0x18] sm:$0xff] %vm2970, %v2957
      %2975 = vst.msk [vmem:[%s424 + $0x20] sm:$0xff] %vm2970, %v2958
      %2976 = vst.msk [vmem:[%s424 + $0x28] sm:$0xff] %vm2970, %v2959
      %2977 = vst.msk [vmem:[%s424 + $0x30] sm:$0xff] %vm2970, %v2960
      %2978 = vst.msk [vmem:[%s424 + $0x38] sm:$0xff] %vm2970, %v2961
      %2979 = vst.msk [vmem:[%s424 + $0x40] sm:$0xff] %vm2970, %v2962
      %2980 = vst.msk [vmem:[%s424 + $0x48] sm:$0xff] %vm2970, %v2963
      %2981 = vst.msk [vmem:[%s424 + $0x50] sm:$0xff] %vm2970, %v2964
      %2982 = vst.msk [vmem:[%s424 + $0x58] sm:$0xff] %vm2970, %v2965
      %2983 = vst.msk [vmem:[%s424 + $0x60] sm:$0xff] %vm2970, %v2966
      %2984 = vst.msk [vmem:[%s424 + $0x68] sm:$0xff] %vm2970, %v2967
      %2985 = vst.msk [vmem:[%s424 + $0x70] sm:$0xff] %vm2970, %v2968
      %2986 = vst.msk [vmem:[%s424 + $0x78] sm:$0xff] %vm2970, %v2969
      %s2987 = smul.u32 16, %s25
      %p2988 = scmp.lt.s32.totalorder %s24, 1
      %s2989 = scalar_select %p2988, %s24, 1
      %p2990 = scmp.lt.s32.totalorder %s2987, 31
      %s2991 = scalar_select %p2990, %s2987, 31
      %s2992 = smul.addr %s2989, 32
      %s2993 = sadd.s32 %s2991, %s2992
      %s2994 = smul.addr %s2993, 8
      %s2995 = scalar_lea.vmem %s9, %s2994
      // Predicated region
      $region57: #{tpu_custom_call.1} parent=55 // pred_check
        %p2996 = pneg %p260
      $region58: #{tpu_custom_call.1} parent=55 // pred_check_branch
        %2998 = sbr.rel (%p2996) target = $region60
      $region59: #{tpu_custom_call.1} parent=55 // pred_region
        %s2999 = smul.u32 16, %s25
      $region60: #{tpu_custom_call.1} parent=55 // pred_fallthru
        _
    $region56: #{tpu_custom_call.1} parent=5 // pred_fallthru
      _
    %p3000 = scmp.le.s32.totalorder 2, %s15
    // Predicated region
    $region61: #{tpu_custom_call.1} parent=5 // pred_check
      %p3001 = pneg %p3000
    $region62: #{tpu_custom_call.1} parent=5 // pred_check_branch
      %3003 = sbr.rel (%p3001) target = $region64
    $region63: #{tpu_custom_call.1} parent=5 // pred_region
      %s3004 = ssub.s32 %s15, 2
      // Predicated region
      $region65: #{tpu_custom_call.1} parent=63 // pred_check
        %p3005 = pneg %p266
      $region66: #{tpu_custom_call.1} parent=63 // pred_check_branch
        %3007 = sbr.rel (%p3005) target = $region68
      $region67: #{tpu_custom_call.1} parent=63 // pred_region
        %s3008 = smul.u32 16, %s27
        %p3009 = scmp.lt.s32.totalorder %s26, 1
        %s3010 = scalar_select %p3009, %s26, 1
        %p3011 = scmp.lt.s32.totalorder %s3008, 31
        %s3012 = scalar_select %p3011, %s3008, 31
        %s3013 = smul.addr %s3010, 32
        %s3014 = sadd.s32 %s3012, %s3013
        %s3015 = smul.addr %s3014, 8
        %s3016 = scalar_lea.vmem %s9, %s3015
      $region68: #{tpu_custom_call.1} parent=63 // pred_fallthru
        _
    $region64: #{tpu_custom_call.1} parent=5 // pred_fallthru
      _
  $region6: #{tpu_custom_call.1} parent=0 // loop_footer
    %s19 = sadd.s32 1, %s15
  $region7: #{tpu_custom_call.1} parent=0 // loop_footer_branch
    %14 = sbr.rel target = $region3
  $region8: #{tpu_custom_call.1} parent=0 // loop_exit
    _

</llo_original>
